<compile_context>
chip_gen: v7x
topology: tpu7x:2x2x1
jax: 0.10.0
libtpu: 0.0.40
codegen_flags: <defaults>
</compile_context>

<pallas_src>
import functools

import jax
import jax.numpy as jnp
from jax.experimental import pallas as pl
from jax.experimental.pallas import tpu as pltpu

# Older JAX releases named this TPUCompilerParams; tiny shim so either works.
_CompilerParams = getattr(pltpu, "CompilerParams", None)
if _CompilerParams is None:  # pragma: no cover - older JAX naming
    _CompilerParams = pltpu.TPUCompilerParams


# --------------------------------------------------------------------------- #
# Fused kernel (conv + BN stats  /  BN + tanh + nearest upsample)
# --------------------------------------------------------------------------- #
def _block_fused_kernel(lhs_ref, b_ref, g_ref, bt_ref, r_ref, rt_ref, u_ref,
                        o_ref, slab_ref, stats_ref, ss_ref, *, eps, inv_nhw,
                        tr, up):
    """Two-phase fused Block forward.

    Grid is (2, num_row_tiles); axis 0 is the phase (both axes 'arbitrary').

    lhs_ref   : (TR, Kp)           im2row rows for this tile (bf16 or f32)
    b_ref     : (Kp, Wc)           banded conv weight (zero-padded K)
    g_ref     : (1, Cout)          BN gamma
    bt_ref    : (1, Cout)          BN beta
    r_ref     : (Wc, Cout)         0/1: reduce (w, c)-packed lanes -> channels
    rt_ref    : (Cout, Wc)         0/1: broadcast channels -> (w, c) lanes
    u_ref     : (Wc, Wuc)          0/1: nearest-neighbour duplication along W
    o_ref     : (TR, up, Wuc)      final lane-dense output tile
    slab_ref  : (NH, Wc)  VMEM     persistent conv slab (f32), never hits HBM
    stats_ref : (2, Wc)   VMEM     running [sum ; sum of squares]
    ss_ref    : (2, Wc)   VMEM     BN [scale ; shift] broadcast to (w, c) lanes
    """
    p = pl.program_id(0)   # phase
    i = pl.program_id(1)   # row tile
    row = pl.multiple_of(i * tr, tr)

    @pl.when(p == 0)
    def _phase0():
        @pl.when(i == 0)
        def _init():
            stats_ref[...] = jnp.zeros_like(stats_ref)

        acc = jnp.dot(lhs_ref[...], b_ref[...],
                      preferred_element_type=jnp.float32)          # (TR, Wc)
        slab_ref[pl.ds(row, tr), :] = acc

        # BN partial statistics on the MXU (ones @ acc), accumulated in VMEM;
        # stat rows written directly (no concatenate / relayout).
        ones = jnp.ones((1, tr), jnp.float32)
        s = jnp.dot(ones, acc, preferred_element_type=jnp.float32)        # (1, Wc)
        sq = jnp.dot(ones, acc * acc, preferred_element_type=jnp.float32)  # (1, Wc)
        stats_ref[0:1, :] = stats_ref[0:1, :] + s
        stats_ref[1:2, :] = stats_ref[1:2, :] + sq

    @pl.when(p == 1)
    def _phase1():
        # Finalize BN scale/shift exactly once (not per tile).
        @pl.when(i == 0)
        def _finalize():
            per_c = jnp.dot(stats_ref[...], r_ref[...],
                            preferred_element_type=jnp.float32)    # (2, Cout)
            mean = per_c[0:1, :] * inv_nhw
            var = per_c[1:2, :] * inv_nhw - mean * mean            # biased var
            scale_c = g_ref[...] * jax.lax.rsqrt(var + eps)        # (1, Cout)
            shift_c = bt_ref[...] - mean * scale_c
            ss_ref[0:1, :] = jnp.dot(scale_c, rt_ref[...],
                                     preferred_element_type=jnp.float32)
            ss_ref[1:2, :] = jnp.dot(shift_c, rt_ref[...],
                                     preferred_element_type=jnp.float32)

        x = slab_ref[pl.ds(row, tr), :]                            # (TR, Wc)
        y = jnp.tanh(x * ss_ref[0:1, :] + ss_ref[1:2, :])
        # W-duplication as an exact 0/1 matmul (lane order stays (w, uw, c)).
        y = jnp.dot(y, u_ref[...], preferred_element_type=jnp.float32)  # (TR, Wuc)
        # H-duplication as a broadcast store (no quadratic Dup matmul).
        yb = y.astype(o_ref.dtype)
        o_ref[...] = jnp.broadcast_to(yb[:, None, :], o_ref.shape)


# --------------------------------------------------------------------------- #
# Wrapper
# --------------------------------------------------------------------------- #
def _pick_tile(n, target, mult):
    """Largest multiple of `mult` dividing `n` and <= min(target, n), else n."""
    t = min(target, n)
    t -= t % mult
    while t >= mult and n % t:
        t -= mult
    return t if (t >= mult and n % t == 0) else n


def _vmem_limit_bytes():
    """Generation-aware scoped VMEM limit (safe on v5e/v6e 128 MiB, v7x 64 MiB)."""
    cap = None
    get_info = getattr(pltpu, "get_tpu_info", None)
    if get_info is not None:
        try:
            cap = getattr(get_info(), "vmem_capacity_bytes", None)
        except Exception:  # pragma: no cover - CPU / older runtime
            cap = None
    if not cap:
        cap = 64 * 1024 * 1024  # conservative (v7x per-TC VMEM)
    return int(min(0.75 * cap, 96 * 1024 * 1024))


@functools.partial(jax.jit, static_argnames=("upsample", "eps", "mxu_dtype"))
def block_forward(x_nchw, w_oihw, gamma, beta, *, upsample=1, eps=1e-5,
                  mxu_dtype=jnp.bfloat16):
    """Pallas equivalent of Block.forward. Input/output are NCHW like PyTorch."""
    N, Cin, H, W = x_nchw.shape
    Cout = w_oihw.shape[0]
    up = int(upsample)
    NH = N * H
    Wp = W + 2
    K = 3 * Wp * Cin                       # true contraction depth
    Kp = max(128, ((K + 127) // 128) * 128)  # MXU-aligned contraction depth
    Wc = W * Cout                          # lane-packed (w, c) width
    Wuc = W * up * Cout                    # upsampled lane width

    # ---- XLA-side layout prep (small; weight-side matrices are input-free). --
    # TODO(synk): replace the XLA im2row prep (transpose/pad/3-row stack) with
    # in-kernel halo DMA (memory_space=pl.ANY) to cut input HBM traffic ~6x->1x.
    x_nhwc = jnp.transpose(x_nchw, (0, 2, 3, 1)).astype(jnp.float32)
    xp = jnp.pad(x_nhwc, ((0, 0), (1, 1), (1, 1), (0, 0)))      # (N, H+2, W+2, Cin)
    lhs = jnp.stack([xp[:, dy:dy + H] for dy in range(3)], axis=2)  # (N,H,3,W+2,Cin)
    lhs = lhs.reshape(NH, K)
    lhs = jnp.pad(lhs, ((0, 0), (0, Kp - K))).astype(mxu_dtype)

    # Banded conv weight: B[(ky, x, ci), (w, co)] = wt[ky, x - w, ci, co].
    # TODO(synk): switch to a per-tap (9 accumulated Cin-contractions) path when
    # W >= ~32 or Cout >= 128 (the band is mostly zeros at large W).
    w_hwio = jnp.transpose(w_oihw, (2, 3, 1, 0)).astype(jnp.float32)  # (3,3,Cin,Cout)
    shifts = jnp.stack(
        [jnp.eye(Wp, W, k=-kx, dtype=jnp.float32) for kx in range(3)])  # (3,W+2,W)
    B = jnp.einsum("kxw,ykcd->yxcwd", shifts, w_hwio).reshape(K, Wc)
    B = jnp.pad(B, ((0, Kp - K), (0, 0))).astype(mxu_dtype)

    # 0/1 helper matrices (exact selections / duplications on the MXU).
    eye_c = jnp.eye(Cout, dtype=jnp.float32)
    R = jnp.tile(eye_c, (W, 1))                                   # (Wc, Cout)
    Rt = jnp.tile(eye_c, (1, W))                                  # (Cout, Wc)
    U = jnp.kron(jnp.eye(W, dtype=jnp.float32),
                 jnp.kron(jnp.ones((1, up), jnp.float32), eye_c))  # (Wc, Wuc)
    g2 = gamma.reshape(1, Cout).astype(jnp.float32)
    b2 = beta.reshape(1, Cout).astype(jnp.float32)

    vmem_limit = _vmem_limit_bytes()
    params = _CompilerParams(dimension_semantics=("arbitrary", "arbitrary"),
                             vmem_limit_bytes=vmem_limit)

    # Row tile: target 512 rows, multiple of 16 for bf16 sublane packing; a
    # single tile is used when the whole slab fits (no forced split).
    row_mult = 16 if mxu_dtype == jnp.bfloat16 else 8
    TR = _pick_tile(NH, 512, row_mult)
    nt = NH // TR

    # The conv slab lives entirely in VMEM scratch (no HBM round-trip).
    slab_bytes = NH * Wc * 4
    # TODO(synk): spill to a two-pass (conv+stats / normalize) pipeline when the
    # conv slab does not fit the scoped VMEM budget; demo shapes always fit.
    assert slab_bytes <= vmem_limit // 2, "conv slab too large for fused kernel"

    inv_nhw = 1.0 / float(N * H * W)
    out_dtype = jnp.float32  # match PyTorch; bf16 store possible if consumer is bf16

    out3d = pl.pallas_call(
        functools.partial(_block_fused_kernel, eps=eps, inv_nhw=inv_nhw,
                          tr=TR, up=up),
        grid=(2, nt),
        in_specs=[
            # lhs: tile i in phase 0; pinned to the last-fetched block in phase 1
            # so no extra DMA is issued after the phase transition.
            pl.BlockSpec((TR, Kp), lambda p, i: (i * (1 - p) + (nt - 1) * p, 0)),
            pl.BlockSpec((Kp, Wc), lambda p, i: (0, 0)),      # banded weight
            pl.BlockSpec((1, Cout), lambda p, i: (0, 0)),     # gamma
            pl.BlockSpec((1, Cout), lambda p, i: (0, 0)),     # beta
            pl.BlockSpec((Wc, Cout), lambda p, i: (0, 0)),    # R
            pl.BlockSpec((Cout, Wc), lambda p, i: (0, 0)),    # R^T
            pl.BlockSpec((Wc, Wuc), lambda p, i: (0, 0)),     # W-duplication
        ],
        # Output blocks are only written in phase 1; during phase 0 the index
        # stays at block 0 so each block is written back exactly once.
        out_specs=pl.BlockSpec((TR, up, Wuc), lambda p, i: (i * p, 0, 0)),
        out_shape=jax.ShapeDtypeStruct((NH, up, Wuc), out_dtype),
        scratch_shapes=[
            pltpu.VMEM((NH, Wc), jnp.float32),   # persistent conv slab
            pltpu.VMEM((2, Wc), jnp.float32),    # running sum / sumsq
            pltpu.VMEM((2, Wc), jnp.float32),    # BN scale / shift
        ],
        compiler_params=params,
    )(lhs, B, g2, b2, R, Rt, U)

    # (N*H, up, W*up*Cout) -> NCHW: reshape + one small transpose in XLA.
    out = out3d.reshape(N, H, up, W, up, Cout)
    out = jnp.transpose(out, (0, 5, 1, 2, 3, 4))
    return out.reshape(N, Cout, H * up, W * up)


# --------------------------------------------------------------------------- #
# Pure-JAX reference (mirrors PyTorch Block.forward)
# --------------------------------------------------------------------------- #
def _reference(x_nchw, w_oihw, gamma, beta, *, upsample, eps):
    conv = jax.lax.conv_general_dilated(
        x_nchw, w_oihw, window_strides=(1, 1), padding=((1, 1), (1, 1)),
        dimension_numbers=("NCHW", "OIHW", "NCHW"),
        precision=jax.lax.Precision.HIGHEST)
    mean = conv.mean(axis=(0, 2, 3), keepdims=True)
    var = ((conv - mean) ** 2).mean(axis=(0, 2, 3), keepdims=True)
    norm = (conv - mean) / jnp.sqrt(var + eps)
    y = jnp.tanh(norm * gamma.reshape(1, -1, 1, 1) + beta.reshape(1, -1, 1, 1))
    if upsample != 1:
        y = jnp.repeat(y, upsample, axis=2)
        y = jnp.repeat(y, upsample, axis=3)
    return y


if __name__ == "__main__":
    # Block(in_channels=4, out_channels=8, upsample=2) at small shapes.
    N, Cin, Cout, H, W = 2, 4, 8, 16, 16
    upsample = 2

    key = jax.random.PRNGKey(0)
    k_x, k_w, k_g, k_b = jax.random.split(key, 4)
    x = jax.random.normal(k_x, (N, Cin, H, W), dtype=jnp.float32)
    w = 0.1 * jax.random.normal(k_w, (Cout, Cin, 3, 3), dtype=jnp.float32)
    # BN affine params (default init is ones/zeros; perturb to exercise them).
    gamma = 1.0 + 0.1 * jax.random.normal(k_g, (Cout,), dtype=jnp.float32)
    beta = 0.1 * jax.random.normal(k_b, (Cout,), dtype=jnp.float32)

    ref = _reference(x, w, gamma, beta, upsample=upsample, eps=1e-5)

    # f32 MXU path: matches the f32 XLA reference tightly.
    out_f32 = jax.block_until_ready(
        block_forward(x, w, gamma, beta, upsample=upsample,
                      mxu_dtype=jnp.float32))
    assert out_f32.shape == (N, Cout, H * upsample, W * upsample), out_f32.shape
    assert jnp.allclose(out_f32, ref, atol=1e-4, rtol=1e-4), float(
        jnp.max(jnp.abs(out_f32 - ref)))

    # bf16 MXU path (default): tolerance sized for bf16 conv-input rounding.
    out_bf16 = jax.block_until_ready(
        block_forward(x, w, gamma, beta, upsample=upsample))
    assert out_bf16.shape == (N, Cout, H * upsample, W * upsample)
    assert jnp.allclose(out_bf16, ref, atol=2.5e-2, rtol=2.5e-2), float(
        jnp.max(jnp.abs(out_bf16 - ref)))

    # upsample=1 edge case (U becomes identity, broadcast store is a no-op dup).
    ref1 = _reference(x, w, gamma, beta, upsample=1, eps=1e-5)
    out1 = jax.block_until_ready(
        block_forward(x, w, gamma, beta, upsample=1, mxu_dtype=jnp.float32))
    assert jnp.allclose(out1, ref1, atol=1e-4, rtol=1e-4), float(
        jnp.max(jnp.abs(out1 - ref1)))

    print("KERNEL_OK")
</pallas_src>

<mosaic_0001>
module attributes {stable_mosaic.version = 11 : i64} {
  func.func @_block_fused_kernel(%arg0: i32, %arg1: i32, %arg2: memref<32x256xf32, #tpu.memory_space<vmem>>, %arg3: memref<256x128xf32, #tpu.memory_space<vmem>>, %arg4: memref<1x8xf32, #tpu.memory_space<vmem>>, %arg5: memref<1x8xf32, #tpu.memory_space<vmem>>, %arg6: memref<128x8xf32, #tpu.memory_space<vmem>>, %arg7: memref<8x128xf32, #tpu.memory_space<vmem>>, %arg8: memref<128x256xf32, #tpu.memory_space<vmem>>, %arg9: memref<32x2x256xf32, #tpu.memory_space<vmem>>, %arg10: memref<32x128xf32, #tpu.memory_space<vmem>>, %arg11: memref<2x128xf32, #tpu.memory_space<vmem>>, %arg12: memref<2x128xf32, #tpu.memory_space<vmem>>) attributes {dimension_semantics = [#tpu.dimension_semantics<arbitrary>, #tpu.dimension_semantics<arbitrary>], iteration_bounds = array<i64: 2, 1>, scalar_prefetch = 0 : i64, scratch_operands = 3 : i64, tpu.core_type = #tpu.core_type<tc>, window_params = [{transform_indices = @transform_0, window_bounds = array<i64: 32, 256>}, {pipeline_mode = #tpu.pipeline_mode<synchronous>, transform_indices = @transform_1, window_bounds = array<i64: 256, 128>}, {pipeline_mode = #tpu.pipeline_mode<synchronous>, transform_indices = @transform_2, window_bounds = array<i64: 1, 8>}, {pipeline_mode = #tpu.pipeline_mode<synchronous>, transform_indices = @transform_3, window_bounds = array<i64: 1, 8>}, {pipeline_mode = #tpu.pipeline_mode<synchronous>, transform_indices = @transform_4, window_bounds = array<i64: 128, 8>}, {pipeline_mode = #tpu.pipeline_mode<synchronous>, transform_indices = @transform_5, window_bounds = array<i64: 8, 128>}, {pipeline_mode = #tpu.pipeline_mode<synchronous>, transform_indices = @transform_6, window_bounds = array<i64: 128, 256>}, {transform_indices = @transform_7, window_bounds = array<i64: 32, 2, 256>}]} {
    %c32_i32 = arith.constant 32 : i32
    %0 = arith.muli %arg1, %c32_i32 : i32
    %1 = tpu.assume_multiple %0, 32 : i32
    %c0_i32 = arith.constant 0 : i32
    %2 = arith.cmpi eq, %arg0, %c0_i32 : i32
    %3 = arith.extui %2 : i1 to i32
    %c0_i32_0 = arith.constant 0 : i32
    %4 = arith.cmpi ne, %3, %c0_i32_0 : i32
    scf.if %4 {
      %c0_i32_2 = arith.constant 0 : i32
      %8 = arith.cmpi eq, %arg1, %c0_i32_2 : i32
      %9 = arith.extui %8 : i1 to i32
      %c0_i32_3 = arith.constant 0 : i32
      %10 = arith.cmpi ne, %9, %c0_i32_3 : i32
      scf.if %10 {
        %cst_18 = arith.constant 0.000000e+00 : f32
        %26 = vector.broadcast %cst_18 : f32 to vector<2x128xf32>
        %c0_19 = arith.constant 0 : index
        %c0_20 = arith.constant 0 : index
        %27 = vector.load %arg11[%c0_19, %c0_20] : memref<2x128xf32, #tpu.memory_space<vmem>>, vector<2x128xf32>
        tpu.vector_store %arg11[%c0_19, %c0_20], %26 {strides = array<i32>} : memref<2x128xf32, #tpu.memory_space<vmem>>, vector<2x128xf32>,
      } else {
      }
      %c0 = arith.constant 0 : index
      %c0_4 = arith.constant 0 : index
      %11 = vector.load %arg2[%c0, %c0_4] : memref<32x256xf32, #tpu.memory_space<vmem>>, vector<32x256xf32>
      %c0_5 = arith.constant 0 : index
      %c0_6 = arith.constant 0 : index
      %12 = vector.load %arg3[%c0_5, %c0_6] : memref<256x128xf32, #tpu.memory_space<vmem>>, vector<256x128xf32>
      %cst = arith.constant dense<0.000000e+00> : vector<32x128xf32>
      %13 = tpu.matmul %11, %12, %cst {dimension_numbers = #tpu.dot_dimension_numbers<[1], [0], [0], [1], [0, 0, 1, 1], [], []>} : vector<32x256xf32>, vector<256x128xf32>, vector<32x128xf32> -> vector<32x128xf32>
      %14 = arith.index_cast %1 : i32 to index
      %c0_7 = arith.constant 0 : index
      %15 = vector.load %arg10[%14, %c0_7] : memref<32x128xf32, #tpu.memory_space<vmem>>, vector<32x128xf32>
      tpu.vector_store %arg10[%14, %c0_7], %13 {strides = array<i32>} : memref<32x128xf32, #tpu.memory_space<vmem>>, vector<32x128xf32>,
      %cst_8 = arith.constant 1.000000e+00 : f32
      %16 = vector.broadcast %cst_8 : f32 to vector<1x32xf32>
      %cst_9 = arith.constant dense<0.000000e+00> : vector<1x128xf32>
      %17 = tpu.matmul %16, %13, %cst_9 {dimension_numbers = #tpu.dot_dimension_numbers<[1], [0], [0], [1], [0, 0, 1, 1], [], []>} : vector<1x32xf32>, vector<32x128xf32>, vector<1x128xf32> -> vector<1x128xf32>
      %18 = arith.mulf %13, %13 : vector<32x128xf32>
      %cst_10 = arith.constant dense<0.000000e+00> : vector<1x128xf32>
      %19 = tpu.matmul %16, %18, %cst_10 {dimension_numbers = #tpu.dot_dimension_numbers<[1], [0], [0], [1], [0, 0, 1, 1], [], []>} : vector<1x32xf32>, vector<32x128xf32>, vector<1x128xf32> -> vector<1x128xf32>
      %c0_11 = arith.constant 0 : index
      %c0_12 = arith.constant 0 : index
      %20 = vector.load %arg11[%c0_11, %c0_12] : memref<2x128xf32, #tpu.memory_space<vmem>>, vector<1x128xf32>
      %21 = arith.addf %20, %17 : vector<1x128xf32>
      %c0_13 = arith.constant 0 : index
      %c0_14 = arith.constant 0 : index
      %22 = vector.load %arg11[%c0_13, %c0_14] : memref<2x128xf32, #tpu.memory_space<vmem>>, vector<1x128xf32>
      tpu.vector_store %arg11[%c0_13, %c0_14], %21 {strides = array<i32>} : memref<2x128xf32, #tpu.memory_space<vmem>>, vector<1x128xf32>,
      %c1 = arith.constant 1 : index
      %c0_15 = arith.constant 0 : index
      %23 = vector.load %arg11[%c1, %c0_15] : memref<2x128xf32, #tpu.memory_space<vmem>>, vector<1x128xf32>
      %24 = arith.addf %23, %19 : vector<1x128xf32>
      %c1_16 = arith.constant 1 : index
      %c0_17 = arith.constant 0 : index
      %25 = vector.load %arg11[%c1_16, %c0_17] : memref<2x128xf32, #tpu.memory_space<vmem>>, vector<1x128xf32>
      tpu.vector_store %arg11[%c1_16, %c0_17], %24 {strides = array<i32>} : memref<2x128xf32, #tpu.memory_space<vmem>>, vector<1x128xf32>,
    } else {
    }
    %c1_i32 = arith.constant 1 : i32
    %5 = arith.cmpi eq, %arg0, %c1_i32 : i32
    %6 = arith.extui %5 : i1 to i32
    %c0_i32_1 = arith.constant 0 : i32
    %7 = arith.cmpi ne, %6, %c0_i32_1 : i32
    scf.if %7 {
      %c0_i32_2 = arith.constant 0 : i32
      %8 = arith.cmpi eq, %arg1, %c0_i32_2 : i32
      %9 = arith.extui %8 : i1 to i32
      %c0_i32_3 = arith.constant 0 : i32
      %10 = arith.cmpi ne, %9, %c0_i32_3 : i32
      scf.if %10 {
        %c0_12 = arith.constant 0 : index
        %c0_13 = arith.constant 0 : index
        %26 = vector.load %arg11[%c0_12, %c0_13] : memref<2x128xf32, #tpu.memory_space<vmem>>, vector<2x128xf32>
        %c0_14 = arith.constant 0 : index
        %c0_15 = arith.constant 0 : index
        %27 = vector.load %arg6[%c0_14, %c0_15] : memref<128x8xf32, #tpu.memory_space<vmem>>, vector<128x8xf32>
        %cst_16 = arith.constant dense<0.000000e+00> : vector<2x8xf32>
        %28 = tpu.matmul %26, %27, %cst_16 {dimension_numbers = #tpu.dot_dimension_numbers<[1], [0], [0], [1], [0, 0, 1, 1], [], []>} : vector<2x128xf32>, vector<128x8xf32>, vector<2x8xf32> -> vector<2x8xf32>
        %29 = vector.extract_strided_slice %28 {offsets = [0, 0], sizes = [1, 8], strides = [1, 1]} : vector<2x8xf32> to vector<1x8xf32>
        %cst_17 = arith.constant 0.001953125 : f32
        %30 = vector.broadcast %cst_17 : f32 to vector<1x8xf32>
        %31 = arith.mulf %29, %30 : vector<1x8xf32>
        %32 = vector.extract_strided_slice %28 {offsets = [1, 0], sizes = [1, 8], strides = [1, 1]} : vector<2x8xf32> to vector<1x8xf32>
        %cst_18 = arith.constant 0.001953125 : f32
        %33 = vector.broadcast %cst_18 : f32 to vector<1x8xf32>
        %34 = arith.mulf %32, %33 : vector<1x8xf32>
        %35 = arith.mulf %31, %31 : vector<1x8xf32>
        %36 = arith.subf %34, %35 : vector<1x8xf32>
        %c0_19 = arith.constant 0 : index
        %c0_20 = arith.constant 0 : index
        %37 = vector.load %arg4[%c0_19, %c0_20] : memref<1x8xf32, #tpu.memory_space<vmem>>, vector<1x8xf32>
        %cst_21 = arith.constant 9.99999974E-6 : f32
        %38 = vector.broadcast %cst_21 : f32 to vector<1x8xf32>
        %39 = arith.addf %36, %38 : vector<1x8xf32>
        %40 = math.rsqrt %39 : vector<1x8xf32>
        %41 = arith.mulf %37, %40 : vector<1x8xf32>
        %c0_22 = arith.constant 0 : index
        %c0_23 = arith.constant 0 : index
        %42 = vector.load %arg5[%c0_22, %c0_23] : memref<1x8xf32, #tpu.memory_space<vmem>>, vector<1x8xf32>
        %43 = arith.mulf %31, %41 : vector<1x8xf32>
        %44 = arith.subf %42, %43 : vector<1x8xf32>
        %c0_24 = arith.constant 0 : index
        %c0_25 = arith.constant 0 : index
        %45 = vector.load %arg7[%c0_24, %c0_25] : memref<8x128xf32, #tpu.memory_space<vmem>>, vector<8x128xf32>
        %cst_26 = arith.constant dense<0.000000e+00> : vector<1x128xf32>
        %46 = tpu.matmul %41, %45, %cst_26 {dimension_numbers = #tpu.dot_dimension_numbers<[1], [0], [0], [1], [0, 0, 1, 1], [], []>} : vector<1x8xf32>, vector<8x128xf32>, vector<1x128xf32> -> vector<1x128xf32>
        %c0_27 = arith.constant 0 : index
        %c0_28 = arith.constant 0 : index
        %47 = vector.load %arg12[%c0_27, %c0_28] : memref<2x128xf32, #tpu.memory_space<vmem>>, vector<1x128xf32>
        tpu.vector_store %arg12[%c0_27, %c0_28], %46 {strides = array<i32>} : memref<2x128xf32, #tpu.memory_space<vmem>>, vector<1x128xf32>,
        %c0_29 = arith.constant 0 : index
        %c0_30 = arith.constant 0 : index
        %48 = vector.load %arg7[%c0_29, %c0_30] : memref<8x128xf32, #tpu.memory_space<vmem>>, vector<8x128xf32>
        %cst_31 = arith.constant dense<0.000000e+00> : vector<1x128xf32>
        %49 = tpu.matmul %44, %48, %cst_31 {dimension_numbers = #tpu.dot_dimension_numbers<[1], [0], [0], [1], [0, 0, 1, 1], [], []>} : vector<1x8xf32>, vector<8x128xf32>, vector<1x128xf32> -> vector<1x128xf32>
        %c1_32 = arith.constant 1 : index
        %c0_33 = arith.constant 0 : index
        %50 = vector.load %arg12[%c1_32, %c0_33] : memref<2x128xf32, #tpu.memory_space<vmem>>, vector<1x128xf32>
        tpu.vector_store %arg12[%c1_32, %c0_33], %49 {strides = array<i32>} : memref<2x128xf32, #tpu.memory_space<vmem>>, vector<1x128xf32>,
      } else {
      }
      %11 = arith.index_cast %1 : i32 to index
      %c0 = arith.constant 0 : index
      %12 = vector.load %arg10[%11, %c0] : memref<32x128xf32, #tpu.memory_space<vmem>>, vector<32x128xf32>
      %c0_4 = arith.constant 0 : index
      %c0_5 = arith.constant 0 : index
      %13 = vector.load %arg12[%c0_4, %c0_5] : memref<2x128xf32, #tpu.memory_space<vmem>>, vector<1x128xf32>
      %14 = vector.broadcast %13 : vector<1x128xf32> to vector<32x128xf32>
      %15 = arith.mulf %12, %14 : vector<32x128xf32>
      %c1 = arith.constant 1 : index
      %c0_6 = arith.constant 0 : index
      %16 = vector.load %arg12[%c1, %c0_6] : memref<2x128xf32, #tpu.memory_space<vmem>>, vector<1x128xf32>
      %17 = vector.broadcast %16 : vector<1x128xf32> to vector<32x128xf32>
      %18 = arith.addf %15, %17 : vector<32x128xf32>
      %19 = math.tanh %18 : vector<32x128xf32>
      %c0_7 = arith.constant 0 : index
      %c0_8 = arith.constant 0 : index
      %20 = vector.load %arg8[%c0_7, %c0_8] : memref<128x256xf32, #tpu.memory_space<vmem>>, vector<128x256xf32>
      %cst = arith.constant dense<0.000000e+00> : vector<32x256xf32>
      %21 = tpu.matmul %19, %20, %cst {dimension_numbers = #tpu.dot_dimension_numbers<[1], [0], [0], [1], [0, 0, 1, 1], [], []>} : vector<32x128xf32>, vector<128x256xf32>, vector<32x256xf32> -> vector<32x256xf32>
      %22 = vector.shape_cast %21 : vector<32x256xf32> to vector<32x1x256xf32>
      %23 = vector.shape_cast %22 : vector<32x1x256xf32> to vector<32x1x256xf32>
      %24 = vector.broadcast %23 : vector<32x1x256xf32> to vector<32x2x256xf32>
      %c0_9 = arith.constant 0 : index
      %c0_10 = arith.constant 0 : index
      %c0_11 = arith.constant 0 : index
      %25 = vector.load %arg9[%c0_9, %c0_10, %c0_11] : memref<32x2x256xf32, #tpu.memory_space<vmem>>, vector<32x2x256xf32>
      tpu.vector_store %arg9[%c0_9, %c0_10, %c0_11], %24 {strides = array<i32>} : memref<32x2x256xf32, #tpu.memory_space<vmem>>, vector<32x2x256xf32>,
    } else {
    }
    return
  }
  func.func @transform_0(%arg0: i32, %arg1: i32) -> (i32, i32) {
    %c1_i32 = arith.constant 1 : i32
    %0 = arith.subi %c1_i32, %arg0 : i32
    %1 = arith.muli %arg1, %0 : i32
    %c0_i32 = arith.constant 0 : i32
    %2 = arith.muli %c0_i32, %arg0 : i32
    %3 = arith.addi %1, %2 : i32
    %c0_i32_0 = arith.constant 0 : i32
    %c0_i32_1 = arith.constant 0 : i32
    return %3, %c0_i32_0 : i32, i32
  }
  func.func @transform_1(%arg0: i32, %arg1: i32) -> (i32, i32) {
    %c0_i32 = arith.constant 0 : i32
    %c0_i32_0 = arith.constant 0 : i32
    %c0_i32_1 = arith.constant 0 : i32
    return %c0_i32, %c0_i32_0 : i32, i32
  }
  func.func @transform_2(%arg0: i32, %arg1: i32) -> (i32, i32) {
    %c0_i32 = arith.constant 0 : i32
    %c0_i32_0 = arith.constant 0 : i32
    %c0_i32_1 = arith.constant 0 : i32
    return %c0_i32, %c0_i32_0 : i32, i32
  }
  func.func @transform_3(%arg0: i32, %arg1: i32) -> (i32, i32) {
    %c0_i32 = arith.constant 0 : i32
    %c0_i32_0 = arith.constant 0 : i32
    %c0_i32_1 = arith.constant 0 : i32
    return %c0_i32, %c0_i32_0 : i32, i32
  }
  func.func @transform_4(%arg0: i32, %arg1: i32) -> (i32, i32) {
    %c0_i32 = arith.constant 0 : i32
    %c0_i32_0 = arith.constant 0 : i32
    %c0_i32_1 = arith.constant 0 : i32
    return %c0_i32, %c0_i32_0 : i32, i32
  }
  func.func @transform_5(%arg0: i32, %arg1: i32) -> (i32, i32) {
    %c0_i32 = arith.constant 0 : i32
    %c0_i32_0 = arith.constant 0 : i32
    %c0_i32_1 = arith.constant 0 : i32
    return %c0_i32, %c0_i32_0 : i32, i32
  }
  func.func @transform_6(%arg0: i32, %arg1: i32) -> (i32, i32) {
    %c0_i32 = arith.constant 0 : i32
    %c0_i32_0 = arith.constant 0 : i32
    %c0_i32_1 = arith.constant 0 : i32
    return %c0_i32, %c0_i32_0 : i32, i32
  }
  func.func @transform_7(%arg0: i32, %arg1: i32) -> (i32, i32, i32) {
    %0 = arith.muli %arg1, %arg0 : i32
    %c0_i32 = arith.constant 0 : i32
    %c0_i32_0 = arith.constant 0 : i32
    %c0_i32_1 = arith.constant 0 : i32
    return %0, %c0_i32, %c0_i32_0 : i32, i32, i32
  }
}

</mosaic_0001>

<llo_original>
// kernel: tile.19
$region0: #{tile.19}
  %s0 = inlined_call_operand.vmem [shape: f32[8,16,8], index: 0, kind: input, shape index: {}]
  %s1 = inlined_call_operand.vmem [shape: f32[8,128], index: 1, kind: output, shape index: {}]
  %s2 = smov 3
  %v3 = vld [vmem:[%s0] ss:$16 sm:%s2]
  %s4 = smov 12
  %v5 = vld [vmem:[%s0] ss:$16 sm:%s4]
  %vm6 = vcmask 1043458
  %v7 = vsel %vm6, %v5, %v3
  %s8 = smov 48
  %v9 = vld [vmem:[%s0] ss:$16 sm:%s8]
  %vm10 = vcmask 1045508
  %v11 = vsel %vm10, %v9, %v7
  %s12 = smov 192
  %v13 = vld [vmem:[%s0] ss:$16 sm:%s12]
  %vm14 = vcmask 1047558
  %v15 = vsel %vm14, %v13, %v11
  %vm16 = vcmask 64512
  %17 = vst.msk [vmem:[%s1] sm:$0xff] %vm16, %v15
  %s18 = scalar_lea.vmem %s0, 15
  %s19 = smov 3
  %v20 = vld [vmem:[%s18] ss:$16 sm:%s19]
  %s21 = scalar_lea.vmem %s0, 15
  %s22 = smov 12
  %v23 = vld [vmem:[%s21] ss:$16 sm:%s22]
  %vm24 = vcmask 1043458
  %v25 = vsel %vm24, %v23, %v20
  %s26 = scalar_lea.vmem %s0, 15
  %s27 = smov 48
  %v28 = vld [vmem:[%s26] ss:$16 sm:%s27]
  %vm29 = vcmask 1045508
  %v30 = vsel %vm29, %v28, %v25
  %s31 = scalar_lea.vmem %s0, 15
  %s32 = smov 192
  %v33 = vld [vmem:[%s31] ss:$16 sm:%s32]
  %vm34 = vcmask 1047558
  %v35 = vsel %vm34, %v33, %v30
  %36 = vrot.lane.b32.xlu0 %v35, 120
  %v37 = vpop.permute.xlu0 %36
  %vm38 = vcmask 1048512
  %39 = vst.msk [vmem:[%s1] sm:$0xff] %vm38, %v37
  %s40 = scalar_lea.vmem %s0, 14
  %s41 = smov 3
  %v42 = vld [vmem:[%s40] ss:$16 sm:%s41]
  %s43 = scalar_lea.vmem %s0, 14
  %s44 = smov 12
  %v45 = vld [vmem:[%s43] ss:$16 sm:%s44]
  %vm46 = vcmask 1043458
  %v47 = vsel %vm46, %v45, %v42
  %s48 = scalar_lea.vmem %s0, 14
  %s49 = smov 48
  %v50 = vld [vmem:[%s48] ss:$16 sm:%s49]
  %vm51 = vcmask 1045508
  %v52 = vsel %vm51, %v50, %v47
  %s53 = scalar_lea.vmem %s0, 14
  %s54 = smov 192
  %v55 = vld [vmem:[%s53] ss:$16 sm:%s54]
  %vm56 = vcmask 1047558
  %v57 = vsel %vm56, %v55, %v52
  %58 = vrot.lane.b32.xlu0 %v57, 112
  %v59 = vpop.permute.xlu0 %58
  %vm60 = vcmask 982912
  %61 = vst.msk [vmem:[%s1] sm:$0xff] %vm60, %v59
  %s62 = scalar_lea.vmem %s0, 13
  %s63 = smov 3
  %v64 = vld [vmem:[%s62] ss:$16 sm:%s63]
  %s65 = scalar_lea.vmem %s0, 13
  %s66 = smov 12
  %v67 = vld [vmem:[%s65] ss:$16 sm:%s66]
  %vm68 = vcmask 1043458
  %v69 = vsel %vm68, %v67, %v64
  %s70 = scalar_lea.vmem %s0, 13
  %s71 = smov 48
  %v72 = vld [vmem:[%s70] ss:$16 sm:%s71]
  %vm73 = vcmask 1045508
  %v74 = vsel %vm73, %v72, %v69
  %s75 = scalar_lea.vmem %s0, 13
  %s76 = smov 192
  %v77 = vld [vmem:[%s75] ss:$16 sm:%s76]
  %vm78 = vcmask 1047558
  %v79 = vsel %vm78, %v77, %v74
  %80 = vrot.lane.b32.xlu0 %v79, 104
  %v81 = vpop.permute.xlu0 %80
  %vm82 = vcmask 917312
  %83 = vst.msk [vmem:[%s1] sm:$0xff] %vm82, %v81
  %s84 = scalar_lea.vmem %s0, 12
  %s85 = smov 3
  %v86 = vld [vmem:[%s84] ss:$16 sm:%s85]
  %s87 = scalar_lea.vmem %s0, 12
  %s88 = smov 12
  %v89 = vld [vmem:[%s87] ss:$16 sm:%s88]
  %vm90 = vcmask 1043458
  %v91 = vsel %vm90, %v89, %v86
  %s92 = scalar_lea.vmem %s0, 12
  %s93 = smov 48
  %v94 = vld [vmem:[%s92] ss:$16 sm:%s93]
  %vm95 = vcmask 1045508
  %v96 = vsel %vm95, %v94, %v91
  %s97 = scalar_lea.vmem %s0, 12
  %s98 = smov 192
  %v99 = vld [vmem:[%s97] ss:$16 sm:%s98]
  %vm100 = vcmask 1047558
  %v101 = vsel %vm100, %v99, %v96
  %102 = vrot.lane.b32.xlu0 %v101, 96
  %v103 = vpop.permute.xlu0 %102
  %vm104 = vcmask 851712
  %105 = vst.msk [vmem:[%s1] sm:$0xff] %vm104, %v103
  %s106 = scalar_lea.vmem %s0, 11
  %s107 = smov 3
  %v108 = vld [vmem:[%s106] ss:$16 sm:%s107]
  %s109 = scalar_lea.vmem %s0, 11
  %s110 = smov 12
  %v111 = vld [vmem:[%s109] ss:$16 sm:%s110]
  %vm112 = vcmask 1043458
  %v113 = vsel %vm112, %v111, %v108
  %s114 = scalar_lea.vmem %s0, 11
  %s115 = smov 48
  %v116 = vld [vmem:[%s114] ss:$16 sm:%s115]
  %vm117 = vcmask 1045508
  %v118 = vsel %vm117, %v116, %v113
  %s119 = scalar_lea.vmem %s0, 11
  %s120 = smov 192
  %v121 = vld [vmem:[%s119] ss:$16 sm:%s120]
  %vm122 = vcmask 1047558
  %v123 = vsel %vm122, %v121, %v118
  %124 = vrot.lane.b32.xlu0 %v123, 88
  %v125 = vpop.permute.xlu0 %124
  %vm126 = vcmask 786112
  %127 = vst.msk [vmem:[%s1] sm:$0xff] %vm126, %v125
  %s128 = scalar_lea.vmem %s0, 10
  %s129 = smov 3
  %v130 = vld [vmem:[%s128] ss:$16 sm:%s129]
  %s131 = scalar_lea.vmem %s0, 10
  %s132 = smov 12
  %v133 = vld [vmem:[%s131] ss:$16 sm:%s132]
  %vm134 = vcmask 1043458
  %v135 = vsel %vm134, %v133, %v130
  %s136 = scalar_lea.vmem %s0, 10
  %s137 = smov 48
  %v138 = vld [vmem:[%s136] ss:$16 sm:%s137]
  %vm139 = vcmask 1045508
  %v140 = vsel %vm139, %v138, %v135
  %s141 = scalar_lea.vmem %s0, 10
  %s142 = smov 192
  %v143 = vld [vmem:[%s141] ss:$16 sm:%s142]
  %vm144 = vcmask 1047558
  %v145 = vsel %vm144, %v143, %v140
  %146 = vrot.lane.b32.xlu0 %v145, 80
  %v147 = vpop.permute.xlu0 %146
  %vm148 = vcmask 720512
  %149 = vst.msk [vmem:[%s1] sm:$0xff] %vm148, %v147
  %s150 = scalar_lea.vmem %s0, 9
  %s151 = smov 3
  %v152 = vld [vmem:[%s150] ss:$16 sm:%s151]
  %s153 = scalar_lea.vmem %s0, 9
  %s154 = smov 12
  %v155 = vld [vmem:[%s153] ss:$16 sm:%s154]
  %vm156 = vcmask 1043458
  %v157 = vsel %vm156, %v155, %v152
  %s158 = scalar_lea.vmem %s0, 9
  %s159 = smov 48
  %v160 = vld [vmem:[%s158] ss:$16 sm:%s159]
  %vm161 = vcmask 1045508
  %v162 = vsel %vm161, %v160, %v157
  %s163 = scalar_lea.vmem %s0, 9
  %s164 = smov 192
  %v165 = vld [vmem:[%s163] ss:$16 sm:%s164]
  %vm166 = vcmask 1047558
  %v167 = vsel %vm166, %v165, %v162
  %168 = vrot.lane.b32.xlu0 %v167, 72
  %v169 = vpop.permute.xlu0 %168
  %vm170 = vcmask 654912
  %171 = vst.msk [vmem:[%s1] sm:$0xff] %vm170, %v169
  %s172 = scalar_lea.vmem %s0, 8
  %s173 = smov 3
  %v174 = vld [vmem:[%s172] ss:$16 sm:%s173]
  %s175 = scalar_lea.vmem %s0, 8
  %s176 = smov 12
  %v177 = vld [vmem:[%s175] ss:$16 sm:%s176]
  %vm178 = vcmask 1043458
  %v179 = vsel %vm178, %v177, %v174
  %s180 = scalar_lea.vmem %s0, 8
  %s181 = smov 48
  %v182 = vld [vmem:[%s180] ss:$16 sm:%s181]
  %vm183 = vcmask 1045508
  %v184 = vsel %vm183, %v182, %v179
  %s185 = scalar_lea.vmem %s0, 8
  %s186 = smov 192
  %v187 = vld [vmem:[%s185] ss:$16 sm:%s186]
  %vm188 = vcmask 1047558
  %v189 = vsel %vm188, %v187, %v184
  %190 = vrot.lane.b32.xlu0 %v189, 64
  %v191 = vpop.permute.xlu0 %190
  %vm192 = vcmask 589312
  %193 = vst.msk [vmem:[%s1] sm:$0xff] %vm192, %v191
  %s194 = scalar_lea.vmem %s0, 7
  %s195 = smov 3
  %v196 = vld [vmem:[%s194] ss:$16 sm:%s195]
  %s197 = scalar_lea.vmem %s0, 7
  %s198 = smov 12
  %v199 = vld [vmem:[%s197] ss:$16 sm:%s198]
  %vm200 = vcmask 1043458
  %v201 = vsel %vm200, %v199, %v196
  %s202 = scalar_lea.vmem %s0, 7
  %s203 = smov 48
  %v204 = vld [vmem:[%s202] ss:$16 sm:%s203]
  %vm205 = vcmask 1045508
  %v206 = vsel %vm205, %v204, %v201
  %s207 = scalar_lea.vmem %s0, 7
  %s208 = smov 192
  %v209 = vld [vmem:[%s207] ss:$16 sm:%s208]
  %vm210 = vcmask 1047558
  %v211 = vsel %vm210, %v209, %v206
  %212 = vrot.lane.b32.xlu0 %v211, 56
  %v213 = vpop.permute.xlu0 %212
  %vm214 = vcmask 523712
  %215 = vst.msk [vmem:[%s1] sm:$0xff] %vm214, %v213
  %s216 = scalar_lea.vmem %s0, 6
  %s217 = smov 3
  %v218 = vld [vmem:[%s216] ss:$16 sm:%s217]
  %s219 = scalar_lea.vmem %s0, 6
  %s220 = smov 12
  %v221 = vld [vmem:[%s219] ss:$16 sm:%s220]
  %vm222 = vcmask 1043458
  %v223 = vsel %vm222, %v221, %v218
  %s224 = scalar_lea.vmem %s0, 6
  %s225 = smov 48
  %v226 = vld [vmem:[%s224] ss:$16 sm:%s225]
  %vm227 = vcmask 1045508
  %v228 = vsel %vm227, %v226, %v223
  %s229 = scalar_lea.vmem %s0, 6
  %s230 = smov 192
  %v231 = vld [vmem:[%s229] ss:$16 sm:%s230]
  %vm232 = vcmask 1047558
  %v233 = vsel %vm232, %v231, %v228
  %234 = vrot.lane.b32.xlu0 %v233, 48
  %v235 = vpop.permute.xlu0 %234
  %vm236 = vcmask 458112
  %237 = vst.msk [vmem:[%s1] sm:$0xff] %vm236, %v235
  %s238 = scalar_lea.vmem %s0, 5
  %s239 = smov 3
  %v240 = vld [vmem:[%s238] ss:$16 sm:%s239]
  %s241 = scalar_lea.vmem %s0, 5
  %s242 = smov 12
  %v243 = vld [vmem:[%s241] ss:$16 sm:%s242]
  %vm244 = vcmask 1043458
  %v245 = vsel %vm244, %v243, %v240
  %s246 = scalar_lea.vmem %s0, 5
  %s247 = smov 48
  %v248 = vld [vmem:[%s246] ss:$16 sm:%s247]
  %vm249 = vcmask 1045508
  %v250 = vsel %vm249, %v248, %v245
  %s251 = scalar_lea.vmem %s0, 5
  %s252 = smov 192
  %v253 = vld [vmem:[%s251] ss:$16 sm:%s252]
  %vm254 = vcmask 1047558
  %v255 = vsel %vm254, %v253, %v250
  %256 = vrot.lane.b32.xlu0 %v255, 40
  %v257 = vpop.permute.xlu0 %256
  %vm258 = vcmask 392512
  %259 = vst.msk [vmem:[%s1] sm:$0xff] %vm258, %v257
  %s260 = scalar_lea.vmem %s0, 4
  %s261 = smov 3
  %v262 = vld [vmem:[%s260] ss:$16 sm:%s261]
  %s263 = scalar_lea.vmem %s0, 4
  %s264 = smov 12
  %v265 = vld [vmem:[%s263] ss:$16 sm:%s264]
  %vm266 = vcmask 1043458
  %v267 = vsel %vm266, %v265, %v262
  %s268 = scalar_lea.vmem %s0, 4
  %s269 = smov 48
  %v270 = vld [vmem:[%s268] ss:$16 sm:%s269]
  %vm271 = vcmask 1045508
  %v272 = vsel %vm271, %v270, %v267
  %s273 = scalar_lea.vmem %s0, 4
  %s274 = smov 192
  %v275 = vld [vmem:[%s273] ss:$16 sm:%s274]
  %vm276 = vcmask 1047558
  %v277 = vsel %vm276, %v275, %v272
  %278 = vrot.lane.b32.xlu0 %v277, 32
  %v279 = vpop.permute.xlu0 %278
  %vm280 = vcmask 326912
  %281 = vst.msk [vmem:[%s1] sm:$0xff] %vm280, %v279
  %s282 = scalar_lea.vmem %s0, 3
  %s283 = smov 3
  %v284 = vld [vmem:[%s282] ss:$16 sm:%s283]
  %s285 = scalar_lea.vmem %s0, 3
  %s286 = smov 12
  %v287 = vld [vmem:[%s285] ss:$16 sm:%s286]
  %vm288 = vcmask 1043458
  %v289 = vsel %vm288, %v287, %v284
  %s290 = scalar_lea.vmem %s0, 3
  %s291 = smov 48
  %v292 = vld [vmem:[%s290] ss:$16 sm:%s291]
  %vm293 = vcmask 1045508
  %v294 = vsel %vm293, %v292, %v289
  %s295 = scalar_lea.vmem %s0, 3
  %s296 = smov 192
  %v297 = vld [vmem:[%s295] ss:$16 sm:%s296]
  %vm298 = vcmask 1047558
  %v299 = vsel %vm298, %v297, %v294
  %300 = vrot.lane.b32.xlu0 %v299, 24
  %v301 = vpop.permute.xlu0 %300
  %vm302 = vcmask 261312
  %303 = vst.msk [vmem:[%s1] sm:$0xff] %vm302, %v301
  %s304 = scalar_lea.vmem %s0, 2
  %s305 = smov 3
  %v306 = vld [vmem:[%s304] ss:$16 sm:%s305]
  %s307 = scalar_lea.vmem %s0, 2
  %s308 = smov 12
  %v309 = vld [vmem:[%s307] ss:$16 sm:%s308]
  %vm310 = vcmask 1043458
  %v311 = vsel %vm310, %v309, %v306
  %s312 = scalar_lea.vmem %s0, 2
  %s313 = smov 48
  %v314 = vld [vmem:[%s312] ss:$16 sm:%s313]
  %vm315 = vcmask 1045508
  %v316 = vsel %vm315, %v314, %v311
  %s317 = scalar_lea.vmem %s0, 2
  %s318 = smov 192
  %v319 = vld [vmem:[%s317] ss:$16 sm:%s318]
  %vm320 = vcmask 1047558
  %v321 = vsel %vm320, %v319, %v316
  %322 = vrot.lane.b32.xlu0 %v321, 16
  %v323 = vpop.permute.xlu0 %322
  %vm324 = vcmask 195712
  %325 = vst.msk [vmem:[%s1] sm:$0xff] %vm324, %v323
  %s326 = scalar_lea.vmem %s0, 1
  %s327 = smov 3
  %v328 = vld [vmem:[%s326] ss:$16 sm:%s327]
  %s329 = scalar_lea.vmem %s0, 1
  %s330 = smov 12
  %v331 = vld [vmem:[%s329] ss:$16 sm:%s330]
  %vm332 = vcmask 1043458
  %v333 = vsel %vm332, %v331, %v328
  %s334 = scalar_lea.vmem %s0, 1
  %s335 = smov 48
  %v336 = vld [vmem:[%s334] ss:$16 sm:%s335]
  %vm337 = vcmask 1045508
  %v338 = vsel %vm337, %v336, %v333
  %s339 = scalar_lea.vmem %s0, 1
  %s340 = smov 192
  %v341 = vld [vmem:[%s339] ss:$16 sm:%s340]
  %vm342 = vcmask 1047558
  %v343 = vsel %vm342, %v341, %v338
  %344 = vrot.lane.b32.xlu0 %v343, 8
  %v345 = vpop.permute.xlu0 %344
  %vm346 = vcmask 130112
  %347 = vst.msk [vmem:[%s1] sm:$0xff] %vm346, %v345

// kernel: block_forward.1
$region0: #{block_forward.1}
  #allocation0 [shape = 'u32[]', space=smem, size = 0x4, offset = 0x4, fixed_abs, tag = 'smem constant byte address 0x4 - core index']
  #allocation1 [shape = 'u32[144,128]{1,0:T(1,128)}', space=vmem, size = 0x12000, scoped, tag = 'internal scratch']
  #allocation2 [shape = 'f32[32,128]{1,0:T(8,128)}', space=vmem, size = 0x4000, scoped, tag = 'scratch operand']
  #allocation3 [shape = 'f32[2,128]{1,0:T(2,128)}', space=vmem, size = 0x400, scoped, tag = 'scratch operand']
  #allocation4 [shape = 'f32[2,128]{1,0:T(2,128)}', space=vmem, size = 0x400, scoped, tag = 'scratch operand']
  %s0 = inlined_call_operand.vmem [shape: f32[32,256], index: 0, kind: input, shape index: {}]
  %s1 = inlined_call_operand.vmem [shape: f32[256,128], index: 1, kind: input, shape index: {}]
  %s2 = inlined_call_operand.vmem [shape: f32[1,8], index: 2, kind: input, shape index: {}]
  %s3 = inlined_call_operand.vmem [shape: f32[1,8], index: 3, kind: input, shape index: {}]
  %s4 = inlined_call_operand.vmem [shape: f32[128,8], index: 4, kind: input, shape index: {}]
  %s5 = inlined_call_operand.vmem [shape: f32[8,128], index: 5, kind: input, shape index: {}]
  %s6 = inlined_call_operand.vmem [shape: f32[128,256], index: 6, kind: input, shape index: {}]
  %s7 = inlined_call_operand.vmem [shape: f32[32,2,256], index: 7, kind: output, shape index: {}]
  %s8 = sld [smem:[#allocation0]]
  $region77: #{block_forward.1} parent=0
    _
  %s10 = ssub.s32 1, %s8
  %s11 = scalar_select 0, %s10, %s8
  loop: start=0, step=1, limit=4
  $region2: #{block_forward.1} parent=0 // loop_pre_header
    _
  $region3: #{block_forward.1} parent=0 // loop_header
    %s13 = sphi 0, %s17
    %p14 = scmp.ge.s32.totalorder %s13, 4
    %s20 = sphi 0, %s32
    %s21 = sphi 0, %s28
    %s22 = sphi 0, %s20
    %s23 = sphi 0, %s21
    %s24 = sphi 0, %s22
    %s25 = sphi 0, %s23
    %s39 = sphi 0, %s41
    %s42 = sphi 0, %s39
    %s43 = sphi 0, %s42
    %s59 = sphi 0, %s43
    %s63 = sphi 0, %s63
    %s65 = sphi 0, %s63
    %s66 = sphi 0, %s65
    %s80 = sphi 0, %s66
    %s84 = sphi 0, %s84
    %s86 = sphi 0, %s84
    %s87 = sphi 0, %s86
    %s101 = sphi 0, %s87
    %s105 = sphi 0, %s105
    %s107 = sphi 0, %s105
    %s108 = sphi 0, %s107
    %s122 = sphi 0, %s108
    %s126 = sphi 0, %s126
    %s128 = sphi 0, %s126
    %s129 = sphi 0, %s128
    %s143 = sphi 0, %s129
    %s147 = sphi 0, %s147
    %s149 = sphi 0, %s147
    %s150 = sphi 0, %s149
    %s164 = sphi 0, %s150
    %s168 = sphi 0, %s168
    %s170 = sphi 0, %s168
    %s171 = sphi 0, %s170
    %s185 = sphi 0, %s171
    %s193 = sphi 0, %s195
    %s196 = sphi 0, %s193
    %s197 = sphi 0, %s196
    %s213 = sphi 0, %s197
  $region4: #{block_forward.1} parent=0 // loop_header_branch
    %16 = sbr.rel (%p14) target = $region8
  $region5: #{block_forward.1} parent=0 // loop_body
    %s18 = ssub.s32 %s13, 1
    %s19 = ssub.s32 %s13, 2
    %s26 = sadd.s32 1, %s21
    %p27 = scmp.ge.s32.totalorder %s26, 1
    %s28 = scalar_select %p27, 0, %s26
    %s29 = sadd.s32 1, %s20
    %s30 = scalar_select %p27, %s29, %s20
    %p31 = scmp.ge.s32.totalorder %s30, 2
    %s32 = scalar_select %p31, 0, %s30
    %s33 = ssub.s32 1, %s20
    %s34 = smul.u32 %s21, %s33
    %s35 = ssub.s32 1, %s32
    %s36 = smul.u32 %s28, %s35
    %s37 = ssub.s32 %s34, %s36
    %p38 = scmp.eq.s32.totalorder %s37, 0
    %s40 = sadd.s32 %s39, 1
    %s41 = scalar_select %p38, %s39, %s40
    %p44 = pneg %p38
    %p45 = scmp.eq.s32.totalorder %s13, 1
    %p46 = por %p44, %p45
    %p47 = scmp.ne.s32.totalorder %s39, %s42
    %p48 = scmp.eq.s32.totalorder %s13, 0
    %p49 = por %p47, %p48
    %p50 = scmp.ne.s32.totalorder %s39, %s42
    %p51 = scmp.eq.s32.totalorder %s18, 1
    %p52 = por %p50, %p51
    %p53 = scmp.ne.s32.totalorder %s42, %s43
    %p54 = scmp.eq.s32.totalorder %s18, 0
    %p55 = por %p53, %p54
    %p56 = scmp.ne.s32.totalorder %s42, %s43
    %p57 = scmp.eq.s32.totalorder %s19, 1
    %p58 = por %p56, %p57
    %p60 = scmp.ne.s32.totalorder %s43, %s59
    %p61 = scmp.eq.s32.totalorder %s19, 0
    %p62 = por %p60, %p61
    %s64 = sadd.s32 %s63, 1
    %p67 = scmp.eq.s32.totalorder %s13, 1
    %p68 = scmp.ne.s32.totalorder %s63, %s65
    %p69 = scmp.eq.s32.totalorder %s13, 0
    %p70 = por %p68, %p69
    %p71 = scmp.ne.s32.totalorder %s63, %s65
    %p72 = scmp.eq.s32.totalorder %s18, 1
    %p73 = por %p71, %p72
    %p74 = scmp.ne.s32.totalorder %s65, %s66
    %p75 = scmp.eq.s32.totalorder %s18, 0
    %p76 = por %p74, %p75
    %p77 = scmp.ne.s32.totalorder %s65, %s66
    %p78 = scmp.eq.s32.totalorder %s19, 1
    %p79 = por %p77, %p78
    %p81 = scmp.ne.s32.totalorder %s66, %s80
    %p82 = scmp.eq.s32.totalorder %s19, 0
    %p83 = por %p81, %p82
    %s85 = sadd.s32 %s84, 1
    %p88 = scmp.eq.s32.totalorder %s13, 1
    %p89 = scmp.ne.s32.totalorder %s84, %s86
    %p90 = scmp.eq.s32.totalorder %s13, 0
    %p91 = por %p89, %p90
    %p92 = scmp.ne.s32.totalorder %s84, %s86
    %p93 = scmp.eq.s32.totalorder %s18, 1
    %p94 = por %p92, %p93
    %p95 = scmp.ne.s32.totalorder %s86, %s87
    %p96 = scmp.eq.s32.totalorder %s18, 0
    %p97 = por %p95, %p96
    %p98 = scmp.ne.s32.totalorder %s86, %s87
    %p99 = scmp.eq.s32.totalorder %s19, 1
    %p100 = por %p98, %p99
    %p102 = scmp.ne.s32.totalorder %s87, %s101
    %p103 = scmp.eq.s32.totalorder %s19, 0
    %p104 = por %p102, %p103
    %s106 = sadd.s32 %s105, 1
    %p109 = scmp.eq.s32.totalorder %s13, 1
    %p110 = scmp.ne.s32.totalorder %s105, %s107
    %p111 = scmp.eq.s32.totalorder %s13, 0
    %p112 = por %p110, %p111
    %p113 = scmp.ne.s32.totalorder %s105, %s107
    %p114 = scmp.eq.s32.totalorder %s18, 1
    %p115 = por %p113, %p114
    %p116 = scmp.ne.s32.totalorder %s107, %s108
    %p117 = scmp.eq.s32.totalorder %s18, 0
    %p118 = por %p116, %p117
    %p119 = scmp.ne.s32.totalorder %s107, %s108
    %p120 = scmp.eq.s32.totalorder %s19, 1
    %p121 = por %p119, %p120
    %p123 = scmp.ne.s32.totalorder %s108, %s122
    %p124 = scmp.eq.s32.totalorder %s19, 0
    %p125 = por %p123, %p124
    %s127 = sadd.s32 %s126, 1
    %p130 = scmp.eq.s32.totalorder %s13, 1
    %p131 = scmp.ne.s32.totalorder %s126, %s128
    %p132 = scmp.eq.s32.totalorder %s13, 0
    %p133 = por %p131, %p132
    %p134 = scmp.ne.s32.totalorder %s126, %s128
    %p135 = scmp.eq.s32.totalorder %s18, 1
    %p136 = por %p134, %p135
    %p137 = scmp.ne.s32.totalorder %s128, %s129
    %p138 = scmp.eq.s32.totalorder %s18, 0
    %p139 = por %p137, %p138
    %p140 = scmp.ne.s32.totalorder %s128, %s129
    %p141 = scmp.eq.s32.totalorder %s19, 1
    %p142 = por %p140, %p141
    %p144 = scmp.ne.s32.totalorder %s129, %s143
    %p145 = scmp.eq.s32.totalorder %s19, 0
    %p146 = por %p144, %p145
    %s148 = sadd.s32 %s147, 1
    %p151 = scmp.eq.s32.totalorder %s13, 1
    %p152 = scmp.ne.s32.totalorder %s147, %s149
    %p153 = scmp.eq.s32.totalorder %s13, 0
    %p154 = por %p152, %p153
    %p155 = scmp.ne.s32.totalorder %s147, %s149
    %p156 = scmp.eq.s32.totalorder %s18, 1
    %p157 = por %p155, %p156
    %p158 = scmp.ne.s32.totalorder %s149, %s150
    %p159 = scmp.eq.s32.totalorder %s18, 0
    %p160 = por %p158, %p159
    %p161 = scmp.ne.s32.totalorder %s149, %s150
    %p162 = scmp.eq.s32.totalorder %s19, 1
    %p163 = por %p161, %p162
    %p165 = scmp.ne.s32.totalorder %s150, %s164
    %p166 = scmp.eq.s32.totalorder %s19, 0
    %p167 = por %p165, %p166
    %s169 = sadd.s32 %s168, 1
    %p172 = scmp.eq.s32.totalorder %s13, 1
    %p173 = scmp.ne.s32.totalorder %s168, %s170
    %p174 = scmp.eq.s32.totalorder %s13, 0
    %p175 = por %p173, %p174
    %p176 = scmp.ne.s32.totalorder %s168, %s170
    %p177 = scmp.eq.s32.totalorder %s18, 1
    %p178 = por %p176, %p177
    %p179 = scmp.ne.s32.totalorder %s170, %s171
    %p180 = scmp.eq.s32.totalorder %s18, 0
    %p181 = por %p179, %p180
    %p182 = scmp.ne.s32.totalorder %s170, %s171
    %p183 = scmp.eq.s32.totalorder %s19, 1
    %p184 = por %p182, %p183
    %p186 = scmp.ne.s32.totalorder %s171, %s185
    %p187 = scmp.eq.s32.totalorder %s19, 0
    %p188 = por %p186, %p187
    %s189 = smul.u32 %s21, %s20
    %s190 = smul.u32 %s28, %s32
    %s191 = ssub.s32 %s189, %s190
    %p192 = scmp.eq.s32.totalorder %s191, 0
    %s194 = sadd.s32 %s193, 1
    %s195 = scalar_select %p192, %s193, %s194
    %p198 = pneg %p192
    %p199 = scmp.eq.s32.totalorder %s13, 1
    %p200 = por %p198, %p199
    %p201 = scmp.ne.s32.totalorder %s193, %s196
    %p202 = scmp.eq.s32.totalorder %s13, 0
    %p203 = por %p201, %p202
    %p204 = scmp.ne.s32.totalorder %s193, %s196
    %p205 = scmp.eq.s32.totalorder %s18, 1
    %p206 = por %p204, %p205
    %p207 = scmp.ne.s32.totalorder %s196, %s197
    %p208 = scmp.eq.s32.totalorder %s18, 0
    %p209 = por %p207, %p208
    %p210 = scmp.ne.s32.totalorder %s196, %s197
    %p211 = scmp.eq.s32.totalorder %s19, 1
    %p212 = por %p210, %p211
    %p214 = scmp.ne.s32.totalorder %s197, %s213
    %p215 = scmp.eq.s32.totalorder %s19, 0
    %p216 = por %p214, %p215
    %p217 = scmp.le.s32.totalorder 1, %s13
    %p218 = scmp.lt.s32.totalorder %s13, 3
    %p219 = pnand %p217, %p218
    %p220 = pneg %p219
    // Predicated region
    $region9: #{block_forward.1} parent=5 // pred_check
      _
    $region10: #{block_forward.1} parent=5 // pred_check_branch
      %222 = sbr.rel (%p219) target = $region12
    $region11: #{block_forward.1} parent=5 // pred_region
      %s223 = ssub.s32 %s13, 1
      // Predicated region
      $region13: #{block_forward.1} parent=11 // pred_check
        %p224 = pneg %p76
      $region14: #{block_forward.1} parent=11 // pred_check_branch
        %226 = sbr.rel (%p224) target = $region16
      $region15: #{block_forward.1} parent=11 // pred_region
        _
      $region16: #{block_forward.1} parent=11 // pred_fallthru
        _
      // Predicated region
      $region17: #{block_forward.1} parent=11 // pred_check
        %p227 = pneg %p97
      $region18: #{block_forward.1} parent=11 // pred_check_branch
        %229 = sbr.rel (%p227) target = $region20
      $region19: #{block_forward.1} parent=11 // pred_region
        _
      $region20: #{block_forward.1} parent=11 // pred_fallthru
        _
      // Predicated region
      $region21: #{block_forward.1} parent=11 // pred_check
        %p230 = pneg %p118
      $region22: #{block_forward.1} parent=11 // pred_check_branch
        %232 = sbr.rel (%p230) target = $region24
      $region23: #{block_forward.1} parent=11 // pred_region
        _
      $region24: #{block_forward.1} parent=11 // pred_fallthru
        _
      // Predicated region
      $region25: #{block_forward.1} parent=11 // pred_check
        %p233 = pneg %p139
      $region26: #{block_forward.1} parent=11 // pred_check_branch
        %235 = sbr.rel (%p233) target = $region28
      $region27: #{block_forward.1} parent=11 // pred_region
        _
      $region28: #{block_forward.1} parent=11 // pred_fallthru
        _
      // Predicated region
      $region29: #{block_forward.1} parent=11 // pred_check
        %p236 = pneg %p160
      $region30: #{block_forward.1} parent=11 // pred_check_branch
        %238 = sbr.rel (%p236) target = $region32
      $region31: #{block_forward.1} parent=11 // pred_region
        _
      $region32: #{block_forward.1} parent=11 // pred_fallthru
        _
      // Predicated region
      $region33: #{block_forward.1} parent=11 // pred_check
        %p239 = pneg %p181
      $region34: #{block_forward.1} parent=11 // pred_check_branch
        %241 = sbr.rel (%p239) target = $region36
      $region35: #{block_forward.1} parent=11 // pred_region
        _
      $region36: #{block_forward.1} parent=11 // pred_fallthru
        _
    $region12: #{block_forward.1} parent=5 // pred_fallthru
      _
    %p242 = scmp.lt.s32.totalorder %s13, 2
    // Predicated region
    $region37: #{block_forward.1} parent=5 // pred_check
      %p243 = pneg %p242
    $region38: #{block_forward.1} parent=5 // pred_check_branch
      %245 = sbr.rel (%p243) target = $region40
    $region39: #{block_forward.1} parent=5 // pred_region
      // Predicated region
      $region41: #{block_forward.1} parent=39 // pred_check
        %p246 = pneg %p49
      $region42: #{block_forward.1} parent=39 // pred_check_branch
        %248 = sbr.rel (%p246) target = $region44
      $region43: #{block_forward.1} parent=39 // pred_region
        %s249 = ssub.s32 1, %s20
        %s250 = smul.u32 %s21, %s249
        %s251 = smul.u32 4, %s250
        %p252 = scmp.lt.s32.totalorder %s251, 3
        %s253 = scalar_select %p252, %s251, 3
        %s254 = smul.addr %s253, 2
        %s255 = smul.addr %s254, 8
        %s256 = scalar_lea.vmem %s0, %s255
        %s257 = ssub.s32 1, %s20
        %s258 = smul.u32 %s21, %s257
        %s259 = smul.u32 4, %s258
      $region44: #{block_forward.1} parent=39 // pred_fallthru
        _
    $region40: #{block_forward.1} parent=5 // pred_fallthru
      _
    %p260 = scmp.le.s32.totalorder 1, %s13
    %p261 = scmp.lt.s32.totalorder %s13, 3
    %p262 = pnand %p260, %p261
    %p263 = pneg %p262
    // Predicated region
    $region45: #{block_forward.1} parent=5 // pred_check
      _
    $region46: #{block_forward.1} parent=5 // pred_check_branch
      %265 = sbr.rel (%p262) target = $region48
    $region47: #{block_forward.1} parent=5 // pred_region
      %s266 = ssub.s32 %s13, 1
      %s267 = ssub.s32 1, %s22
      %s268 = smul.u32 %s23, %s267
      %s269 = smul.u32 4, %s268
      %p270 = scmp.lt.s32.totalorder %s269, 3
      %s271 = scalar_select %p270, %s269, 3
      %s272 = smul.addr %s271, 2
      %s273 = smul.addr %s272, 8
      %s274 = scalar_lea.vmem %s0, %s273
      %p275 = pneg %p55
      %p276 = pneg %p52
      %p277 = pneg %p76
      %p278 = pneg %p73
      %p279 = pneg %p97
      %p280 = pneg %p94
      %p281 = pneg %p118
      %p282 = pneg %p115
      %p283 = pneg %p139
      %p284 = pneg %p136
      %p285 = pneg %p160
      %p286 = pneg %p157
      %p287 = pneg %p181
      %p288 = pneg %p178
      %p289 = pneg %p209
      %p290 = pneg %p206
      %s291 = smul.u32 %s23, %s22
      %s292 = smul.u32 32, %s291
      %p293 = scmp.lt.s32.totalorder %s292, 31
      %s294 = scalar_select %p293, %s292, 31
      %s295 = smul.addr %s294, 2
      %s296 = smul.addr %s295, 2
      %s297 = scalar_lea.vmem %s7, %s296
      %s298 = ssub.s32 1, %s22
      %s299 = smul.u32 %s23, %s298
      %s300 = smul.u32 4, %s299
      %p301 = scmp.lt.s32.totalorder %s300, 3
      %s302 = scalar_select %p301, %s300, 3
      %s303 = smul.addr %s302, 2
      %s304 = smul.addr %s303, 8
      %s305 = scalar_lea.vmem %s0, %s304
      %s306 = ssub.s32 1, %s22
      %s307 = smul.u32 %s23, %s306
      %s308 = smul.u32 4, %s307
      %s309 = smul.u32 %s23, %s22
      %s310 = smul.u32 32, %s309
      %p311 = scmp.lt.s32.totalorder %s310, 31
      %s312 = scalar_select %p311, %s310, 31
      %s313 = smul.addr %s312, 2
      %s314 = smul.addr %s313, 2
      %s315 = scalar_lea.vmem %s7, %s314
      %s316 = smul.u32 %s23, %s22
      %s317 = smul.u32 32, %s316
      %s318 = smul.u32 %s23, 32
      %p319 = scmp.eq.s32.totalorder %s22, 0
      // Predicated region
      $region49: #{block_forward.1} parent=47 // pred_check
        %p320 = pneg %p319
      $region50: #{block_forward.1} parent=47 // pred_check_branch
        %322 = sbr.rel (%p320) target = $region52
      $region51: #{block_forward.1} parent=47 // pred_region
        %p323 = scmp.eq.s32.totalorder %s23, 0
        // Predicated region
        $region53: #{block_forward.1} parent=51 // pred_check
          %p324 = pneg %p323
        $region54: #{block_forward.1} parent=51 // pred_check_branch
          %326 = sbr.rel (%p324) target = $region56
        $region55: #{block_forward.1} parent=51 // pred_region
          %327 = vst [vmem:[#allocation3] sm:$0x3] 0.0
        $region56: #{block_forward.1} parent=51 // pred_fallthru
          _
        %v328 = vld [vmem:[%s305] sm:$0xff]
        %v329 = vld [vmem:[%s305 + $0x8] sm:$0xff]
        %v330 = vld [vmem:[%s305 + $0x10] sm:$0xff]
        %v331 = vld [vmem:[%s305 + $0x18] sm:$0xff]
        %v332 = vld [vmem:[%s305 + $0x20] sm:$0xff]
        %v333 = vld [vmem:[%s305 + $0x28] sm:$0xff]
        %v334 = vld [vmem:[%s305 + $0x30] sm:$0xff]
        %v335 = vld [vmem:[%s305 + $0x38] sm:$0xff]
        %v336 = vld [vmem:[%s1] sm:$0xff]
        %v337 = vld [vmem:[%s1 + $0x8] sm:$0xff]
        %v338 = vld [vmem:[%s1 + $0x10] sm:$0xff]
        %v339 = vld [vmem:[%s1 + $0x18] sm:$0xff]
        %v340 = vld [vmem:[%s1 + $0x20] sm:$0xff]
        %v341 = vld [vmem:[%s1 + $0x28] sm:$0xff]
        %v342 = vld [vmem:[%s1 + $0x30] sm:$0xff]
        %v343 = vld [vmem:[%s1 + $0x38] sm:$0xff]
        %v344 = vld [vmem:[%s1 + $0x40] sm:$0xff]
        %v345 = vld [vmem:[%s1 + $0x48] sm:$0xff]
        %v346 = vld [vmem:[%s1 + $0x50] sm:$0xff]
        %v347 = vld [vmem:[%s1 + $0x58] sm:$0xff]
        %v348 = vld [vmem:[%s1 + $0x60] sm:$0xff]
        %v349 = vld [vmem:[%s1 + $0x68] sm:$0xff]
        %v350 = vld [vmem:[%s1 + $0x70] sm:$0xff]
        %v351 = vld [vmem:[%s1 + $0x78] sm:$0xff]
        %v352 = vld [vmem:[%s1 + $0x80] sm:$0xff]
        %v353 = vld [vmem:[%s1 + $0x88] sm:$0xff]
        %v354 = vld [vmem:[%s1 + $0x90] sm:$0xff]
        %v355 = vld [vmem:[%s1 + $0x98] sm:$0xff]
        %v356 = vld [vmem:[%s1 + $0xa0] sm:$0xff]
        %v357 = vld [vmem:[%s1 + $0xa8] sm:$0xff]
        %v358 = vld [vmem:[%s1 + $0xb0] sm:$0xff]
        %v359 = vld [vmem:[%s1 + $0xb8] sm:$0xff]
        %v360 = vld [vmem:[%s1 + $0xc0] sm:$0xff]
        %v361 = vld [vmem:[%s1 + $0xc8] sm:$0xff]
        %v362 = vld [vmem:[%s1 + $0xd0] sm:$0xff]
        %v363 = vld [vmem:[%s1 + $0xd8] sm:$0xff]
        %v364 = vld [vmem:[%s1 + $0xe0] sm:$0xff]
        %v365 = vld [vmem:[%s1 + $0xe8] sm:$0xff]
        %v366 = vld [vmem:[%s1 + $0xf0] sm:$0xff]
        %v367 = vld [vmem:[%s1 + $0xf8] sm:$0xff]
        %368 = vmatprep.subr.mxu0 0.0
        %369 = vmatpush1.msra.mxu0 %v336
        %370 = vmatprep.subr.mxu0 0.0
        %371 = vmatpush1.msra.mxu0 %v337
        %372 = vmatprep.subr.mxu0 0.0
        %373 = vmatpush1.msra.mxu0 %v338
        %374 = vmatprep.subr.mxu0 0.0
        %375 = vmatpush1.msra.mxu0 %v339
        %376 = vmatprep.subr.mxu0 0.0
        %377 = vmatpush1.msra.mxu0 %v340
        %378 = vmatprep.subr.mxu0 0.0
        %379 = vmatpush1.msra.mxu0 %v341
        %380 = vmatprep.subr.mxu0 0.0
        %381 = vmatpush1.msra.mxu0 %v342
        %382 = vmatprep.subr.mxu0 0.0
        %383 = vmatpush1.msra.mxu0 %v343
        %384 = vmatprep.subr.mxu0 0.0
        %385 = vmatpush1.msra.mxu0 %v344
        %386 = vmatprep.subr.mxu0 0.0
        %387 = vmatpush1.msra.mxu0 %v345
        %388 = vmatprep.subr.mxu0 0.0
        %389 = vmatpush1.msra.mxu0 %v346
        %390 = vmatprep.subr.mxu0 0.0
        %391 = vmatpush1.msra.mxu0 %v347
        %392 = vmatprep.subr.mxu0 0.0
        %393 = vmatpush1.msra.mxu0 %v348
        %394 = vmatprep.subr.mxu0 0.0
        %395 = vmatpush1.msra.mxu0 %v349
        %396 = vmatprep.subr.mxu0 0.0
        %397 = vmatpush1.msra.mxu0 %v350
        %398 = vmatprep.subr.mxu0 0.0
        %399 = vmatpush1.msra.mxu0 %v351
        %400 = vmatprep.subr.mxu0 0.0
        %401 = vmatpush1.msra.mxu0 %v352
        %402 = vmatprep.subr.mxu0 0.0
        %403 = vmatpush1.msra.mxu0 %v353
        %404 = vmatprep.subr.mxu0 0.0
        %405 = vmatpush1.msra.mxu0 %v354
        %406 = vmatprep.subr.mxu0 0.0
        %407 = vmatpush1.msra.mxu0 %v355
        %408 = vmatprep.subr.mxu0 0.0
        %409 = vmatpush1.msra.mxu0 %v356
        %410 = vmatprep.subr.mxu0 0.0
        %411 = vmatpush1.msra.mxu0 %v357
        %412 = vmatprep.subr.mxu0 0.0
        %413 = vmatpush1.msra.mxu0 %v358
        %414 = vmatprep.subr.mxu0 0.0
        %415 = vmatpush1.msra.mxu0 %v359
        %416 = vmatprep.subr.mxu0 0.0
        %417 = vmatpush1.msra.mxu0 %v360
        %418 = vmatprep.subr.mxu0 0.0
        %419 = vmatpush1.msra.mxu0 %v361
        %420 = vmatprep.subr.mxu0 0.0
        %421 = vmatpush1.msra.mxu0 %v362
        %422 = vmatprep.subr.mxu0 0.0
        %423 = vmatpush1.msra.mxu0 %v363
        %424 = vmatprep.subr.mxu0 0.0
        %425 = vmatpush1.msra.mxu0 %v364
        %426 = vmatprep.subr.mxu0 0.0
        %427 = vmatpush1.msra.mxu0 %v365
        %428 = vmatprep.subr.mxu0 0.0
        %429 = vmatpush1.msra.mxu0 %v366
        %430 = vmatprep.subr.mxu0 0.0
        %431 = vmatpush1.msra.mxu0 %v367
        %432 = vmatprep.mubr.f32.mxu0 %v329
        %433 = vmatmul.mubr.f32.gmra.mrb[0].mxu0 %v328
        %v434 = vpop.f32.mrb[0].mxu0
        %v435 = vadd.f32 0.0, %v434
        %v436 = vpop.f32.mrb[0].mxu0
        %437 = vmatprep.mubr.f32.mxu0 %v331
        %438 = vmatmul.mubr.f32.gmra.mrb[0].mxu0 %v330
        %v439 = vpop.f32.mrb[0].mxu0
        %v440 = vadd.f32 0.0, %v439
        %v441 = vpop.f32.mrb[0].mxu0
        %442 = vmatprep.mubr.f32.mxu0 %v333
        %443 = vmatmul.mubr.f32.gmra.mrb[0].mxu0 %v332
        %v444 = vpop.f32.mrb[0].mxu0
        %v445 = vadd.f32 0.0, %v444
        %v446 = vpop.f32.mrb[0].mxu0
        %447 = vmatprep.mubr.f32.mxu0 %v335
        %448 = vmatmul.mubr.f32.gmra.mrb[0].mxu0 %v334
        %v449 = vpop.f32.mrb[0].mxu0
        %v450 = vadd.f32 0.0, %v449
        %v451 = vpop.f32.mrb[0].mxu0
        %452 = vdwg.mxu0
        %s453 = scalar_lea.vmem [#allocation2], %s318
        %454 = vst [vmem:[%s453] sm:$0xff] %v435
        %455 = vst [vmem:[%s453 + $0x8] sm:$0xff] %v440
        %456 = vst [vmem:[%s453 + $0x10] sm:$0xff] %v445
        %457 = vst [vmem:[%s453 + $0x18] sm:$0xff] %v450
        %vm458 = vcmask 261120
        %v460 = vsel %vm458, 1.0, 0
        %462 = vmatprep.subr.mxu0 0.0
        %463 = vmatpush1.msra.mxu0 %v435
        %464 = vmatprep.subr.mxu0 0.0
        %465 = vmatpush1.msra.mxu0 %v440
        %466 = vmatprep.subr.mxu0 0.0
        %467 = vmatpush1.msra.mxu0 %v445
        %468 = vmatprep.subr.mxu0 0.0
        %469 = vmatpush1.msra.mxu0 %v450
        %470 = vmatprep.subr.mxu0 0.0
        %471 = vmatpush1.msra.mxu0 0.0
        %472 = vmatprep.subr.mxu0 0.0
        %473 = vmatpush1.msra.mxu0 0.0
        %474 = vmatprep.subr.mxu0 0.0
        %475 = vmatpush1.msra.mxu0 0.0
        %476 = vmatprep.subr.mxu0 0.0
        %477 = vmatpush1.msra.mxu0 0.0
        %478 = vmatprep.subr.mxu0 0.0
        %479 = vmatpush1.msra.mxu0 0.0
        %480 = vmatprep.subr.mxu0 0.0
        %481 = vmatpush1.msra.mxu0 0.0
        %482 = vmatprep.subr.mxu0 0.0
        %483 = vmatpush1.msra.mxu0 0.0
        %484 = vmatprep.subr.mxu0 0.0
        %485 = vmatpush1.msra.mxu0 0.0
        %486 = vmatprep.subr.mxu0 0.0
        %487 = vmatpush1.msra.mxu0 0.0
        %488 = vmatprep.subr.mxu0 0.0
        %489 = vmatpush1.msra.mxu0 0.0
        %490 = vmatprep.subr.mxu0 0.0
        %491 = vmatpush1.msra.mxu0 0.0
        %492 = vmatprep.subr.mxu0 0.0
        %493 = vmatpush1.msra.mxu0 0.0
        %494 = vmatprep.subr.mxu0 0.0
        %495 = vmatpush1.msra.mxu0 0.0
        %496 = vmatprep.subr.mxu0 0.0
        %497 = vmatpush1.msra.mxu0 0.0
        %498 = vmatprep.subr.mxu0 0.0
        %499 = vmatpush1.msra.mxu0 0.0
        %500 = vmatprep.subr.mxu0 0.0
        %501 = vmatpush1.msra.mxu0 0.0
        %502 = vmatprep.subr.mxu0 0.0
        %503 = vmatpush1.msra.mxu0 0.0
        %504 = vmatprep.subr.mxu0 0.0
        %505 = vmatpush1.msra.mxu0 0.0
        %506 = vmatprep.subr.mxu0 0.0
        %507 = vmatpush1.msra.mxu0 0.0
        %508 = vmatprep.subr.mxu0 0.0
        %509 = vmatpush1.msra.mxu0 0.0
        %510 = vmatprep.subr.mxu0 0.0
        %511 = vmatpush1.msra.mxu0 0.0
        %512 = vmatprep.subr.mxu0 0.0
        %513 = vmatpush1.msra.mxu0 0.0
        %514 = vmatprep.subr.mxu0 0.0
        %515 = vmatpush1.msra.mxu0 0.0
        %516 = vmatprep.subr.mxu0 0.0
        %517 = vmatpush1.msra.mxu0 0.0
        %518 = vmatprep.subr.mxu0 0.0
        %519 = vmatpush1.msra.mxu0 0.0
        %520 = vmatprep.subr.mxu0 0.0
        %521 = vmatpush1.msra.mxu0 0.0
        %522 = vmatprep.subr.mxu0 0.0
        %523 = vmatpush1.msra.mxu0 0.0
        %524 = vmatprep.subr.mxu0 0.0
        %525 = vmatpush1.msra.mxu0 0.0
        %526 = vmatprep.mubr.f32.mxu0 0.0
        %527 = vmatmul.mubr.f32.gmra.mrb[0].mxu0 %v460
        %v528 = vpop.f32.mrb[0].mxu0
        %v529 = vadd.f32 0.0, %v528
        %v530 = vpop.f32.mrb[0].mxu0
        %531 = vdwg.mxu0
        %v532 = vmul.f32 %v435, %v435
        %v533 = vmul.f32 %v440, %v440
        %v534 = vmul.f32 %v445, %v445
        %v535 = vmul.f32 %v450, %v450
        %536 = vmatprep.subr.mxu0 0.0
        %537 = vmatpush1.msra.mxu0 %v532
        %538 = vmatprep.subr.mxu0 0.0
        %539 = vmatpush1.msra.mxu0 %v533
        %540 = vmatprep.subr.mxu0 0.0
        %541 = vmatpush1.msra.mxu0 %v534
        %542 = vmatprep.subr.mxu0 0.0
        %543 = vmatpush1.msra.mxu0 %v535
        %544 = vmatprep.subr.mxu0 0.0
        %545 = vmatpush1.msra.mxu0 0.0
        %546 = vmatprep.subr.mxu0 0.0
        %547 = vmatpush1.msra.mxu0 0.0
        %548 = vmatprep.subr.mxu0 0.0
        %549 = vmatpush1.msra.mxu0 0.0
        %550 = vmatprep.subr.mxu0 0.0
        %551 = vmatpush1.msra.mxu0 0.0
        %552 = vmatprep.subr.mxu0 0.0
        %553 = vmatpush1.msra.mxu0 0.0
        %554 = vmatprep.subr.mxu0 0.0
        %555 = vmatpush1.msra.mxu0 0.0
        %556 = vmatprep.subr.mxu0 0.0
        %557 = vmatpush1.msra.mxu0 0.0
        %558 = vmatprep.subr.mxu0 0.0
        %559 = vmatpush1.msra.mxu0 0.0
        %560 = vmatprep.subr.mxu0 0.0
        %561 = vmatpush1.msra.mxu0 0.0
        %562 = vmatprep.subr.mxu0 0.0
        %563 = vmatpush1.msra.mxu0 0.0
        %564 = vmatprep.subr.mxu0 0.0
        %565 = vmatpush1.msra.mxu0 0.0
        %566 = vmatprep.subr.mxu0 0.0
        %567 = vmatpush1.msra.mxu0 0.0
        %568 = vmatprep.subr.mxu0 0.0
        %569 = vmatpush1.msra.mxu0 0.0
        %570 = vmatprep.subr.mxu0 0.0
        %571 = vmatpush1.msra.mxu0 0.0
        %572 = vmatprep.subr.mxu0 0.0
        %573 = vmatpush1.msra.mxu0 0.0
        %574 = vmatprep.subr.mxu0 0.0
        %575 = vmatpush1.msra.mxu0 0.0
        %576 = vmatprep.subr.mxu0 0.0
        %577 = vmatpush1.msra.mxu0 0.0
        %578 = vmatprep.subr.mxu0 0.0
        %579 = vmatpush1.msra.mxu0 0.0
        %580 = vmatprep.subr.mxu0 0.0
        %581 = vmatpush1.msra.mxu0 0.0
        %582 = vmatprep.subr.mxu0 0.0
        %583 = vmatpush1.msra.mxu0 0.0
        %584 = vmatprep.subr.mxu0 0.0
        %585 = vmatpush1.msra.mxu0 0.0
        %586 = vmatprep.subr.mxu0 0.0
        %587 = vmatpush1.msra.mxu0 0.0
        %588 = vmatprep.subr.mxu0 0.0
        %589 = vmatpush1.msra.mxu0 0.0
        %590 = vmatprep.subr.mxu0 0.0
        %591 = vmatpush1.msra.mxu0 0.0
        %592 = vmatprep.subr.mxu0 0.0
        %593 = vmatpush1.msra.mxu0 0.0
        %594 = vmatprep.subr.mxu0 0.0
        %595 = vmatpush1.msra.mxu0 0.0
        %596 = vmatprep.subr.mxu0 0.0
        %597 = vmatpush1.msra.mxu0 0.0
        %598 = vmatprep.subr.mxu0 0.0
        %599 = vmatpush1.msra.mxu0 0.0
        %600 = vmatprep.mubr.f32.mxu0 0.0
        %601 = vmatmul.mubr.f32.gmra.mrb[0].mxu0 %v460
        %v602 = vpop.f32.mrb[0].mxu0
        %v603 = vadd.f32 0.0, %v602
        %v604 = vpop.f32.mrb[0].mxu0
        %605 = vdwg.mxu0
        %v606 = vld [vmem:[#allocation3] sm:$0x1]
        %v607 = vadd.f32 %v606, %v529
        %608 = vst [vmem:[#allocation3] sm:$0x1] %v607
        %v609 = vld [vmem:[#allocation3 + $0x1] sm:$0x1]
        %v610 = vadd.f32 %v609, %v603
        %611 = vst [vmem:[#allocation3 + $0x1] sm:$0x1] %v610
      $region52: #{block_forward.1} parent=47 // pred_fallthru
        _
      %p612 = scmp.eq.s32.totalorder %s22, 1
      // Predicated region
      $region57: #{block_forward.1} parent=47 // pred_check
        %p613 = pneg %p612
      $region58: #{block_forward.1} parent=47 // pred_check_branch
        %615 = sbr.rel (%p613) target = $region60
      $region59: #{block_forward.1} parent=47 // pred_region
        %p616 = scmp.eq.s32.totalorder %s23, 0
        // Predicated region
        $region61: #{block_forward.1} parent=59 // pred_check
          %p617 = pneg %p616
        $region62: #{block_forward.1} parent=59 // pred_check_branch
          %619 = sbr.rel (%p617) target = $region64
        $region63: #{block_forward.1} parent=59 // pred_region
          %v620 = vld [vmem:[#allocation3] sm:$0x3]
          %v621 = vld [vmem:[%s4] sm:$0xff]
          %v622 = vld [vmem:[%s4 + $0x8] sm:$0xff]
          %v623 = vld [vmem:[%s4 + $0x10] sm:$0xff]
          %v624 = vld [vmem:[%s4 + $0x18] sm:$0xff]
          %v625 = vld [vmem:[%s4 + $0x20] sm:$0xff]
          %v626 = vld [vmem:[%s4 + $0x28] sm:$0xff]
          %v627 = vld [vmem:[%s4 + $0x30] sm:$0xff]
          %v628 = vld [vmem:[%s4 + $0x38] sm:$0xff]
          %v629 = vld [vmem:[%s4 + $0x40] sm:$0xff]
          %v630 = vld [vmem:[%s4 + $0x48] sm:$0xff]
          %v631 = vld [vmem:[%s4 + $0x50] sm:$0xff]
          %v632 = vld [vmem:[%s4 + $0x58] sm:$0xff]
          %v633 = vld [vmem:[%s4 + $0x60] sm:$0xff]
          %v634 = vld [vmem:[%s4 + $0x68] sm:$0xff]
          %v635 = vld [vmem:[%s4 + $0x70] sm:$0xff]
          %v636 = vld [vmem:[%s4 + $0x78] sm:$0xff]
          %637 = vmatprep.subr.mxu0 0.0
          %638 = vmatpush1.msra.mxu0 %v621
          %639 = vmatprep.subr.mxu0 0.0
          %640 = vmatpush1.msra.mxu0 %v622
          %641 = vmatprep.subr.mxu0 0.0
          %642 = vmatpush1.msra.mxu0 %v623
          %643 = vmatprep.subr.mxu0 0.0
          %644 = vmatpush1.msra.mxu0 %v624
          %645 = vmatprep.subr.mxu0 0.0
          %646 = vmatpush1.msra.mxu0 %v625
          %647 = vmatprep.subr.mxu0 0.0
          %648 = vmatpush1.msra.mxu0 %v626
          %649 = vmatprep.subr.mxu0 0.0
          %650 = vmatpush1.msra.mxu0 %v627
          %651 = vmatprep.subr.mxu0 0.0
          %652 = vmatpush1.msra.mxu0 %v628
          %653 = vmatprep.subr.mxu0 0.0
          %654 = vmatpush1.msra.mxu0 %v629
          %655 = vmatprep.subr.mxu0 0.0
          %656 = vmatpush1.msra.mxu0 %v630
          %657 = vmatprep.subr.mxu0 0.0
          %658 = vmatpush1.msra.mxu0 %v631
          %659 = vmatprep.subr.mxu0 0.0
          %660 = vmatpush1.msra.mxu0 %v632
          %661 = vmatprep.subr.mxu0 0.0
          %662 = vmatpush1.msra.mxu0 %v633
          %663 = vmatprep.subr.mxu0 0.0
          %664 = vmatpush1.msra.mxu0 %v634
          %665 = vmatprep.subr.mxu0 0.0
          %666 = vmatpush1.msra.mxu0 %v635
          %667 = vmatprep.subr.mxu0 0.0
          %668 = vmatpush1.msra.mxu0 %v636
          %669 = vmatprep.subr.mxu0 0.0
          %670 = vmatpush1.msra.mxu0 0.0
          %671 = vmatprep.subr.mxu0 0.0
          %672 = vmatpush1.msra.mxu0 0.0
          %673 = vmatprep.subr.mxu0 0.0
          %674 = vmatpush1.msra.mxu0 0.0
          %675 = vmatprep.subr.mxu0 0.0
          %676 = vmatpush1.msra.mxu0 0.0
          %677 = vmatprep.subr.mxu0 0.0
          %678 = vmatpush1.msra.mxu0 0.0
          %679 = vmatprep.subr.mxu0 0.0
          %680 = vmatpush1.msra.mxu0 0.0
          %681 = vmatprep.subr.mxu0 0.0
          %682 = vmatpush1.msra.mxu0 0.0
          %683 = vmatprep.subr.mxu0 0.0
          %684 = vmatpush1.msra.mxu0 0.0
          %685 = vmatprep.subr.mxu0 0.0
          %686 = vmatpush1.msra.mxu0 0.0
          %687 = vmatprep.subr.mxu0 0.0
          %688 = vmatpush1.msra.mxu0 0.0
          %689 = vmatprep.subr.mxu0 0.0
          %690 = vmatpush1.msra.mxu0 0.0
          %691 = vmatprep.subr.mxu0 0.0
          %692 = vmatpush1.msra.mxu0 0.0
          %693 = vmatprep.subr.mxu0 0.0
          %694 = vmatpush1.msra.mxu0 0.0
          %695 = vmatprep.subr.mxu0 0.0
          %696 = vmatpush1.msra.mxu0 0.0
          %697 = vmatprep.subr.mxu0 0.0
          %698 = vmatpush1.msra.mxu0 0.0
          %699 = vmatprep.subr.mxu0 0.0
          %700 = vmatpush1.msra.mxu0 0.0
          %701 = vmatprep.mubr.f32.mxu0 0.0
          %702 = vmatmul.mubr.f32.gmra.mrb[0].mxu0 %v620
          %v703 = vpop.f32.mrb[0].mxu0
          %v704 = vadd.f32 0.0, %v703
          %v705 = vpop.f32.mrb[0].mxu0
          %706 = vdwg.mxu0
          %v707 = vmul.f32 %v704, 0.001953125
          %v708 = vmul.f32 %v707, %v707
          %v710 = vrot.slane %v708, 7
          %v712 = vsub.f32 %v707, %v710
          %v713 = vld [vmem:[%s2] sm:$0x1]
          %v714 = vadd.f32 %v712, 1e-05
          %v715 = vrsqrt.pop %v714
          %v718 = vunpack.c.l.s4 1966171168
          %v719 = vunpack.c.0.s8 %v718
          %v720 = vlaneseq
          %v721 = vshrl.u32 %v720, 7
          %v722 = vsub.s32 %v719, %v721
          %v723 = vrot.slane %v715, %v722
          %v724 = vcombine.high %v723, %v723
          %v726 = vunpack.c.l.s4 1966171168
          %v727 = vunpack.c.0.s8 %v726
          %v728 = vlaneseq
          %v729 = vshrl.u32 %v728, 7
          %v730 = vsub.s32 %v727, %v729
          %v731 = vrot.slane %v724, %v730
          %v733 = vmul.f32 %v713, %v731
          %v734 = vld [vmem:[%s3] sm:$0x1]
          %v735 = vmul.f32 %v707, %v733
          %v736 = vsub.f32 %v734, %v735
          %v737 = vld [vmem:[%s5] sm:$0xff]
          %vm738 = vcmask 64512
          %v740 = vsel %vm738, %v733, 0
          %742 = vmatprep.subr.mxu0 0.0
          %743 = vmatpush1.msra.mxu0 %v737
          %744 = vmatprep.subr.mxu0 0.0
          %745 = vmatpush1.msra.mxu0 0.0
          %746 = vmatprep.subr.mxu0 0.0
          %747 = vmatpush1.msra.mxu0 0.0
          %748 = vmatprep.subr.mxu0 0.0
          %749 = vmatpush1.msra.mxu0 0.0
          %750 = vmatprep.subr.mxu0 0.0
          %751 = vmatpush1.msra.mxu0 0.0
          %752 = vmatprep.subr.mxu0 0.0
          %753 = vmatpush1.msra.mxu0 0.0
          %754 = vmatprep.subr.mxu0 0.0
          %755 = vmatpush1.msra.mxu0 0.0
          %756 = vmatprep.subr.mxu0 0.0
          %757 = vmatpush1.msra.mxu0 0.0
          %758 = vmatprep.subr.mxu0 0.0
          %759 = vmatpush1.msra.mxu0 0.0
          %760 = vmatprep.subr.mxu0 0.0
          %761 = vmatpush1.msra.mxu0 0.0
          %762 = vmatprep.subr.mxu0 0.0
          %763 = vmatpush1.msra.mxu0 0.0
          %764 = vmatprep.subr.mxu0 0.0
          %765 = vmatpush1.msra.mxu0 0.0
          %766 = vmatprep.subr.mxu0 0.0
          %767 = vmatpush1.msra.mxu0 0.0
          %768 = vmatprep.subr.mxu0 0.0
          %769 = vmatpush1.msra.mxu0 0.0
          %770 = vmatprep.subr.mxu0 0.0
          %771 = vmatpush1.msra.mxu0 0.0
          %772 = vmatprep.subr.mxu0 0.0
          %773 = vmatpush1.msra.mxu0 0.0
          %774 = vmatprep.subr.mxu0 0.0
          %775 = vmatpush1.msra.mxu0 0.0
          %776 = vmatprep.subr.mxu0 0.0
          %777 = vmatpush1.msra.mxu0 0.0
          %778 = vmatprep.subr.mxu0 0.0
          %779 = vmatpush1.msra.mxu0 0.0
          %780 = vmatprep.subr.mxu0 0.0
          %781 = vmatpush1.msra.mxu0 0.0
          %782 = vmatprep.subr.mxu0 0.0
          %783 = vmatpush1.msra.mxu0 0.0
          %784 = vmatprep.subr.mxu0 0.0
          %785 = vmatpush1.msra.mxu0 0.0
          %786 = vmatprep.subr.mxu0 0.0
          %787 = vmatpush1.msra.mxu0 0.0
          %788 = vmatprep.subr.mxu0 0.0
          %789 = vmatpush1.msra.mxu0 0.0
          %790 = vmatprep.subr.mxu0 0.0
          %791 = vmatpush1.msra.mxu0 0.0
          %792 = vmatprep.subr.mxu0 0.0
          %793 = vmatpush1.msra.mxu0 0.0
          %794 = vmatprep.subr.mxu0 0.0
          %795 = vmatpush1.msra.mxu0 0.0
          %796 = vmatprep.subr.mxu0 0.0
          %797 = vmatpush1.msra.mxu0 0.0
          %798 = vmatprep.subr.mxu0 0.0
          %799 = vmatpush1.msra.mxu0 0.0
          %800 = vmatprep.subr.mxu0 0.0
          %801 = vmatpush1.msra.mxu0 0.0
          %802 = vmatprep.subr.mxu0 0.0
          %803 = vmatpush1.msra.mxu0 0.0
          %804 = vmatprep.subr.mxu0 0.0
          %805 = vmatpush1.msra.mxu0 0.0
          %806 = vmatprep.mubr.f32.mxu0 0.0
          %807 = vmatmul.mubr.f32.gmra.mrb[0].mxu0 %v740
          %v808 = vpop.f32.mrb[0].mxu0
          %v809 = vadd.f32 0.0, %v808
          %v810 = vpop.f32.mrb[0].mxu0
          %811 = vdwg.mxu0
          %812 = vst [vmem:[#allocation4] sm:$0x1] %v809
          %v813 = vld [vmem:[%s5] sm:$0xff]
          %v815 = vsel %vm738, %v736, 0
          %817 = vmatprep.subr.mxu0 0.0
          %818 = vmatpush1.msra.mxu0 %v813
          %819 = vmatprep.subr.mxu0 0.0
          %820 = vmatpush1.msra.mxu0 0.0
          %821 = vmatprep.subr.mxu0 0.0
          %822 = vmatpush1.msra.mxu0 0.0
          %823 = vmatprep.subr.mxu0 0.0
          %824 = vmatpush1.msra.mxu0 0.0
          %825 = vmatprep.subr.mxu0 0.0
          %826 = vmatpush1.msra.mxu0 0.0
          %827 = vmatprep.subr.mxu0 0.0
          %828 = vmatpush1.msra.mxu0 0.0
          %829 = vmatprep.subr.mxu0 0.0
          %830 = vmatpush1.msra.mxu0 0.0
          %831 = vmatprep.subr.mxu0 0.0
          %832 = vmatpush1.msra.mxu0 0.0
          %833 = vmatprep.subr.mxu0 0.0
          %834 = vmatpush1.msra.mxu0 0.0
          %835 = vmatprep.subr.mxu0 0.0
          %836 = vmatpush1.msra.mxu0 0.0
          %837 = vmatprep.subr.mxu0 0.0
          %838 = vmatpush1.msra.mxu0 0.0
          %839 = vmatprep.subr.mxu0 0.0
          %840 = vmatpush1.msra.mxu0 0.0
          %841 = vmatprep.subr.mxu0 0.0
          %842 = vmatpush1.msra.mxu0 0.0
          %843 = vmatprep.subr.mxu0 0.0
          %844 = vmatpush1.msra.mxu0 0.0
          %845 = vmatprep.subr.mxu0 0.0
          %846 = vmatpush1.msra.mxu0 0.0
          %847 = vmatprep.subr.mxu0 0.0
          %848 = vmatpush1.msra.mxu0 0.0
          %849 = vmatprep.subr.mxu0 0.0
          %850 = vmatpush1.msra.mxu0 0.0
          %851 = vmatprep.subr.mxu0 0.0
          %852 = vmatpush1.msra.mxu0 0.0
          %853 = vmatprep.subr.mxu0 0.0
          %854 = vmatpush1.msra.mxu0 0.0
          %855 = vmatprep.subr.mxu0 0.0
          %856 = vmatpush1.msra.mxu0 0.0
          %857 = vmatprep.subr.mxu0 0.0
          %858 = vmatpush1.msra.mxu0 0.0
          %859 = vmatprep.subr.mxu0 0.0
          %860 = vmatpush1.msra.mxu0 0.0
          %861 = vmatprep.subr.mxu0 0.0
          %862 = vmatpush1.msra.mxu0 0.0
          %863 = vmatprep.subr.mxu0 0.0
          %864 = vmatpush1.msra.mxu0 0.0
          %865 = vmatprep.subr.mxu0 0.0
          %866 = vmatpush1.msra.mxu0 0.0
          %867 = vmatprep.subr.mxu0 0.0
          %868 = vmatpush1.msra.mxu0 0.0
          %869 = vmatprep.subr.mxu0 0.0
          %870 = vmatpush1.msra.mxu0 0.0
          %871 = vmatprep.subr.mxu0 0.0
          %872 = vmatpush1.msra.mxu0 0.0
          %873 = vmatprep.subr.mxu0 0.0
          %874 = vmatpush1.msra.mxu0 0.0
          %875 = vmatprep.subr.mxu0 0.0
          %876 = vmatpush1.msra.mxu0 0.0
          %877 = vmatprep.subr.mxu0 0.0
          %878 = vmatpush1.msra.mxu0 0.0
          %879 = vmatprep.subr.mxu0 0.0
          %880 = vmatpush1.msra.mxu0 0.0
          %881 = vmatprep.mubr.f32.mxu0 0.0
          %882 = vmatmul.mubr.f32.gmra.mrb[0].mxu0 %v815
          %v883 = vpop.f32.mrb[0].mxu0
          %v884 = vadd.f32 0.0, %v883
          %v885 = vpop.f32.mrb[0].mxu0
          %886 = vdwg.mxu0
          %887 = vst [vmem:[#allocation4 + $0x1] sm:$0x1] %v884
        $region64: #{block_forward.1} parent=59 // pred_fallthru
          _
        %s888 = scalar_lea.vmem [#allocation2], %s318
        %v889 = vld [vmem:[%s888] sm:$0xff]
        %v890 = vld [vmem:[%s888 + $0x8] sm:$0xff]
        %v891 = vld [vmem:[%s888 + $0x10] sm:$0xff]
        %v892 = vld [vmem:[%s888 + $0x18] sm:$0xff]
        %v893 = vld [vmem:[#allocation4] sm:$0x1]
        %v894 = vlaneseq
        %v895 = vshrl.u32 %v894, 7
        %v896 = vsub.s32 0, %v895
        %v897 = vrot.slane %v893, %v896
        %v898 = vmul.f32 %v889, %v897
        %v899 = vmul.f32 %v890, %v897
        %v900 = vmul.f32 %v891, %v897
        %v901 = vmul.f32 %v892, %v897
        %v902 = vld [vmem:[#allocation4 + $0x1] sm:$0x1]
        %v903 = vlaneseq
        %v904 = vshrl.u32 %v903, 7
        %v905 = vsub.s32 0, %v904
        %v906 = vrot.slane %v902, %v905
        %v907 = vadd.f32 %v898, %v906
        %v908 = vadd.f32 %v899, %v906
        %v909 = vadd.f32 %v900, %v906
        %v910 = vadd.f32 %v901, %v906
        %v911 = vtanh.pop %v907
        %v912 = vtanh.pop %v908
        %v913 = vtanh.pop %v909
        %v914 = vtanh.pop %v910
        %v915 = vld [vmem:[%s6] sm:$0xff]
        %v916 = vld [vmem:[%s6 + $0x8] sm:$0xff]
        %v917 = vld [vmem:[%s6 + $0x10] sm:$0xff]
        %v918 = vld [vmem:[%s6 + $0x18] sm:$0xff]
        %v919 = vld [vmem:[%s6 + $0x20] sm:$0xff]
        %v920 = vld [vmem:[%s6 + $0x28] sm:$0xff]
        %v921 = vld [vmem:[%s6 + $0x30] sm:$0xff]
        %v922 = vld [vmem:[%s6 + $0x38] sm:$0xff]
        %v923 = vld [vmem:[%s6 + $0x40] sm:$0xff]
        %v924 = vld [vmem:[%s6 + $0x48] sm:$0xff]
        %v925 = vld [vmem:[%s6 + $0x50] sm:$0xff]
        %v926 = vld [vmem:[%s6 + $0x58] sm:$0xff]
        %v927 = vld [vmem:[%s6 + $0x60] sm:$0xff]
        %v928 = vld [vmem:[%s6 + $0x68] sm:$0xff]
        %v929 = vld [vmem:[%s6 + $0x70] sm:$0xff]
        %v930 = vld [vmem:[%s6 + $0x78] sm:$0xff]
        %v931 = vld [vmem:[%s6 + $0x80] sm:$0xff]
        %v932 = vld [vmem:[%s6 + $0x88] sm:$0xff]
        %v933 = vld [vmem:[%s6 + $0x90] sm:$0xff]
        %v934 = vld [vmem:[%s6 + $0x98] sm:$0xff]
        %v935 = vld [vmem:[%s6 + $0xa0] sm:$0xff]
        %v936 = vld [vmem:[%s6 + $0xa8] sm:$0xff]
        %v937 = vld [vmem:[%s6 + $0xb0] sm:$0xff]
        %v938 = vld [vmem:[%s6 + $0xb8] sm:$0xff]
        %v939 = vld [vmem:[%s6 + $0xc0] sm:$0xff]
        %v940 = vld [vmem:[%s6 + $0xc8] sm:$0xff]
        %v941 = vld [vmem:[%s6 + $0xd0] sm:$0xff]
        %v942 = vld [vmem:[%s6 + $0xd8] sm:$0xff]
        %v943 = vld [vmem:[%s6 + $0xe0] sm:$0xff]
        %v944 = vld [vmem:[%s6 + $0xe8] sm:$0xff]
        %v945 = vld [vmem:[%s6 + $0xf0] sm:$0xff]
        %v946 = vld [vmem:[%s6 + $0xf8] sm:$0xff]
        %947 = vmatprep.subr.mxu0 %v916
        %948 = vmatpush1.msra.mxu0 %v915
        %949 = vmatprep.subr.mxu0 %v918
        %950 = vmatpush1.msra.mxu0 %v917
        %951 = vmatprep.subr.mxu0 %v920
        %952 = vmatpush1.msra.mxu0 %v919
        %953 = vmatprep.subr.mxu0 %v922
        %954 = vmatpush1.msra.mxu0 %v921
        %955 = vmatprep.subr.mxu0 %v924
        %956 = vmatpush1.msra.mxu0 %v923
        %957 = vmatprep.subr.mxu0 %v926
        %958 = vmatpush1.msra.mxu0 %v925
        %959 = vmatprep.subr.mxu0 %v928
        %960 = vmatpush1.msra.mxu0 %v927
        %961 = vmatprep.subr.mxu0 %v930
        %962 = vmatpush1.msra.mxu0 %v929
        %963 = vmatprep.subr.mxu0 %v932
        %964 = vmatpush1.msra.mxu0 %v931
        %965 = vmatprep.subr.mxu0 %v934
        %966 = vmatpush1.msra.mxu0 %v933
        %967 = vmatprep.subr.mxu0 %v936
        %968 = vmatpush1.msra.mxu0 %v935
        %969 = vmatprep.subr.mxu0 %v938
        %970 = vmatpush1.msra.mxu0 %v937
        %971 = vmatprep.subr.mxu0 %v940
        %972 = vmatpush1.msra.mxu0 %v939
        %973 = vmatprep.subr.mxu0 %v942
        %974 = vmatpush1.msra.mxu0 %v941
        %975 = vmatprep.subr.mxu0 %v944
        %976 = vmatpush1.msra.mxu0 %v943
        %977 = vmatprep.subr.mxu0 %v946
        %978 = vmatpush1.msra.mxu0 %v945
        %979 = vmatprep.subr.mxu0 0.0
        %980 = vmatpush1.msra.mxu0 0.0
        %981 = vmatprep.subr.mxu0 0.0
        %982 = vmatpush1.msra.mxu0 0.0
        %983 = vmatprep.subr.mxu0 0.0
        %984 = vmatpush1.msra.mxu0 0.0
        %985 = vmatprep.subr.mxu0 0.0
        %986 = vmatpush1.msra.mxu0 0.0
        %987 = vmatprep.subr.mxu0 0.0
        %988 = vmatpush1.msra.mxu0 0.0
        %989 = vmatprep.subr.mxu0 0.0
        %990 = vmatpush1.msra.mxu0 0.0
        %991 = vmatprep.subr.mxu0 0.0
        %992 = vmatpush1.msra.mxu0 0.0
        %993 = vmatprep.subr.mxu0 0.0
        %994 = vmatpush1.msra.mxu0 0.0
        %995 = vmatprep.subr.mxu0 0.0
        %996 = vmatpush1.msra.mxu0 0.0
        %997 = vmatprep.subr.mxu0 0.0
        %998 = vmatpush1.msra.mxu0 0.0
        %999 = vmatprep.subr.mxu0 0.0
        %1000 = vmatpush1.msra.mxu0 0.0
        %1001 = vmatprep.subr.mxu0 0.0
        %1002 = vmatpush1.msra.mxu0 0.0
        %1003 = vmatprep.subr.mxu0 0.0
        %1004 = vmatpush1.msra.mxu0 0.0
        %1005 = vmatprep.subr.mxu0 0.0
        %1006 = vmatpush1.msra.mxu0 0.0
        %1007 = vmatprep.subr.mxu0 0.0
        %1008 = vmatpush1.msra.mxu0 0.0
        %1009 = vmatprep.subr.mxu0 0.0
        %1010 = vmatpush1.msra.mxu0 0.0
        %1011 = vmatprep.mubr.f32.mxu0 0.0
        %1012 = vmatmul.mubr.f32.gmra.mrb[0].mxu0 %v911
        %v1013 = vpop.f32.mrb[0].mxu0
        %v1014 = vadd.f32 0.0, %v1013
        %v1015 = vpop.f32.mrb[0].mxu0
        %v1016 = vadd.f32 0.0, %v1015
        %1017 = vmatprep.mubr.f32.mxu0 0.0
        %1018 = vmatmul.mubr.f32.gmra.mrb[0].mxu0 %v912
        %v1019 = vpop.f32.mrb[0].mxu0
        %v1020 = vadd.f32 0.0, %v1019
        %v1021 = vpop.f32.mrb[0].mxu0
        %v1022 = vadd.f32 0.0, %v1021
        %1023 = vmatprep.mubr.f32.mxu0 0.0
        %1024 = vmatmul.mubr.f32.gmra.mrb[0].mxu0 %v913
        %v1025 = vpop.f32.mrb[0].mxu0
        %v1026 = vadd.f32 0.0, %v1025
        %v1027 = vpop.f32.mrb[0].mxu0
        %v1028 = vadd.f32 0.0, %v1027
        %1029 = vmatprep.mubr.f32.mxu0 0.0
        %1030 = vmatmul.mubr.f32.gmra.mrb[0].mxu0 %v914
        %v1031 = vpop.f32.mrb[0].mxu0
        %v1032 = vadd.f32 0.0, %v1031
        %v1033 = vpop.f32.mrb[0].mxu0
        %v1034 = vadd.f32 0.0, %v1033
        %1035 = vdwg.mxu0
        %v1044 = vcombine.low %v1014, %v1016
        %v1045 = vcombine.high %v1014, %v1016
        %v1047 = vunpack.c.l.s4 1966171168
        %v1048 = vunpack.c.0.s8 %v1047
        %v1049 = vlaneseq
        %v1050 = vshrl.u32 %v1049, 7
        %v1051 = vsub.s32 %v1048, %v1050
        %v1052 = vrot.slane %v1044, %v1051
        %v1054 = vunpack.c.l.s4 1966171168
        %v1055 = vunpack.c.0.s8 %v1054
        %v1056 = vlaneseq
        %v1057 = vshrl.u32 %v1056, 7
        %v1058 = vsub.s32 %v1055, %v1057
        %v1059 = vrot.slane %v1045, %v1058
        %v1060 = vcombine.high %v1052, %v1052
        %v1061 = vcombine.high %v1059, %v1059
        %v1063 = vunpack.c.l.s4 1966171168
        %v1064 = vunpack.c.0.s8 %v1063
        %v1065 = vlaneseq
        %v1066 = vshrl.u32 %v1065, 7
        %v1067 = vsub.s32 %v1064, %v1066
        %v1068 = vrot.slane %v1052, %v1067
        %v1070 = vunpack.c.l.s4 1966171168
        %v1071 = vunpack.c.0.s8 %v1070
        %v1072 = vlaneseq
        %v1073 = vshrl.u32 %v1072, 7
        %v1074 = vsub.s32 %v1071, %v1073
        %v1075 = vrot.slane %v1059, %v1074
        %v1077 = vunpack.c.l.s4 1966171168
        %v1078 = vunpack.c.0.s8 %v1077
        %v1079 = vlaneseq
        %v1080 = vshrl.u32 %v1079, 7
        %v1081 = vsub.s32 %v1078, %v1080
        %v1082 = vrot.slane %v1060, %v1081
        %v1084 = vunpack.c.l.s4 1966171168
        %v1085 = vunpack.c.0.s8 %v1084
        %v1086 = vlaneseq
        %v1087 = vshrl.u32 %v1086, 7
        %v1088 = vsub.s32 %v1085, %v1087
        %v1089 = vrot.slane %v1061, %v1088
        %v1090 = vcombine.high %v1068, %v1068
        %v1091 = vcombine.high %v1075, %v1075
        %v1092 = vcombine.high %v1082, %v1082
        %v1093 = vcombine.high %v1089, %v1089
        %v1094 = vcombine.low %v1020, %v1022
        %v1095 = vcombine.high %v1020, %v1022
        %v1097 = vunpack.c.l.s4 1966171168
        %v1098 = vunpack.c.0.s8 %v1097
        %v1099 = vlaneseq
        %v1100 = vshrl.u32 %v1099, 7
        %v1101 = vsub.s32 %v1098, %v1100
        %v1102 = vrot.slane %v1094, %v1101
        %v1104 = vunpack.c.l.s4 1966171168
        %v1105 = vunpack.c.0.s8 %v1104
        %v1106 = vlaneseq
        %v1107 = vshrl.u32 %v1106, 7
        %v1108 = vsub.s32 %v1105, %v1107
        %v1109 = vrot.slane %v1095, %v1108
        %v1110 = vcombine.high %v1102, %v1102
        %v1111 = vcombine.high %v1109, %v1109
        %v1113 = vunpack.c.l.s4 1966171168
        %v1114 = vunpack.c.0.s8 %v1113
        %v1115 = vlaneseq
        %v1116 = vshrl.u32 %v1115, 7
        %v1117 = vsub.s32 %v1114, %v1116
        %v1118 = vrot.slane %v1102, %v1117
        %v1120 = vunpack.c.l.s4 1966171168
        %v1121 = vunpack.c.0.s8 %v1120
        %v1122 = vlaneseq
        %v1123 = vshrl.u32 %v1122, 7
        %v1124 = vsub.s32 %v1121, %v1123
        %v1125 = vrot.slane %v1109, %v1124
        %v1127 = vunpack.c.l.s4 1966171168
        %v1128 = vunpack.c.0.s8 %v1127
        %v1129 = vlaneseq
        %v1130 = vshrl.u32 %v1129, 7
        %v1131 = vsub.s32 %v1128, %v1130
        %v1132 = vrot.slane %v1110, %v1131
        %v1134 = vunpack.c.l.s4 1966171168
        %v1135 = vunpack.c.0.s8 %v1134
        %v1136 = vlaneseq
        %v1137 = vshrl.u32 %v1136, 7
        %v1138 = vsub.s32 %v1135, %v1137
        %v1139 = vrot.slane %v1111, %v1138
        %v1140 = vcombine.high %v1118, %v1118
        %v1141 = vcombine.high %v1125, %v1125
        %v1142 = vcombine.high %v1132, %v1132
        %v1143 = vcombine.high %v1139, %v1139
        %v1144 = vcombine.low %v1026, %v1028
        %v1145 = vcombine.high %v1026, %v1028
        %v1147 = vunpack.c.l.s4 1966171168
        %v1148 = vunpack.c.0.s8 %v1147
        %v1149 = vlaneseq
        %v1150 = vshrl.u32 %v1149, 7
        %v1151 = vsub.s32 %v1148, %v1150
        %v1152 = vrot.slane %v1144, %v1151
        %v1154 = vunpack.c.l.s4 1966171168
        %v1155 = vunpack.c.0.s8 %v1154
        %v1156 = vlaneseq
        %v1157 = vshrl.u32 %v1156, 7
        %v1158 = vsub.s32 %v1155, %v1157
        %v1159 = vrot.slane %v1145, %v1158
        %v1160 = vcombine.high %v1152, %v1152
        %v1161 = vcombine.high %v1159, %v1159
        %v1163 = vunpack.c.l.s4 1966171168
        %v1164 = vunpack.c.0.s8 %v1163
        %v1165 = vlaneseq
        %v1166 = vshrl.u32 %v1165, 7
        %v1167 = vsub.s32 %v1164, %v1166
        %v1168 = vrot.slane %v1152, %v1167
        %v1170 = vunpack.c.l.s4 1966171168
        %v1171 = vunpack.c.0.s8 %v1170
        %v1172 = vlaneseq
        %v1173 = vshrl.u32 %v1172, 7
        %v1174 = vsub.s32 %v1171, %v1173
        %v1175 = vrot.slane %v1159, %v1174
        %v1177 = vunpack.c.l.s4 1966171168
        %v1178 = vunpack.c.0.s8 %v1177
        %v1179 = vlaneseq
        %v1180 = vshrl.u32 %v1179, 7
        %v1181 = vsub.s32 %v1178, %v1180
        %v1182 = vrot.slane %v1160, %v1181
        %v1184 = vunpack.c.l.s4 1966171168
        %v1185 = vunpack.c.0.s8 %v1184
        %v1186 = vlaneseq
        %v1187 = vshrl.u32 %v1186, 7
        %v1188 = vsub.s32 %v1185, %v1187
        %v1189 = vrot.slane %v1161, %v1188
        %v1190 = vcombine.high %v1168, %v1168
        %v1191 = vcombine.high %v1175, %v1175
        %v1192 = vcombine.high %v1182, %v1182
        %v1193 = vcombine.high %v1189, %v1189
        %v1194 = vcombine.low %v1032, %v1034
        %v1195 = vcombine.high %v1032, %v1034
        %v1197 = vunpack.c.l.s4 1966171168
        %v1198 = vunpack.c.0.s8 %v1197
        %v1199 = vlaneseq
        %v1200 = vshrl.u32 %v1199, 7
        %v1201 = vsub.s32 %v1198, %v1200
        %v1202 = vrot.slane %v1194, %v1201
        %v1204 = vunpack.c.l.s4 1966171168
        %v1205 = vunpack.c.0.s8 %v1204
        %v1206 = vlaneseq
        %v1207 = vshrl.u32 %v1206, 7
        %v1208 = vsub.s32 %v1205, %v1207
        %v1209 = vrot.slane %v1195, %v1208
        %v1210 = vcombine.high %v1202, %v1202
        %v1211 = vcombine.high %v1209, %v1209
        %v1213 = vunpack.c.l.s4 1966171168
        %v1214 = vunpack.c.0.s8 %v1213
        %v1215 = vlaneseq
        %v1216 = vshrl.u32 %v1215, 7
        %v1217 = vsub.s32 %v1214, %v1216
        %v1218 = vrot.slane %v1202, %v1217
        %v1220 = vunpack.c.l.s4 1966171168
        %v1221 = vunpack.c.0.s8 %v1220
        %v1222 = vlaneseq
        %v1223 = vshrl.u32 %v1222, 7
        %v1224 = vsub.s32 %v1221, %v1223
        %v1225 = vrot.slane %v1209, %v1224
        %v1227 = vunpack.c.l.s4 1966171168
        %v1228 = vunpack.c.0.s8 %v1227
        %v1229 = vlaneseq
        %v1230 = vshrl.u32 %v1229, 7
        %v1231 = vsub.s32 %v1228, %v1230
        %v1232 = vrot.slane %v1210, %v1231
        %v1234 = vunpack.c.l.s4 1966171168
        %v1235 = vunpack.c.0.s8 %v1234
        %v1236 = vlaneseq
        %v1237 = vshrl.u32 %v1236, 7
        %v1238 = vsub.s32 %v1235, %v1237
        %v1239 = vrot.slane %v1211, %v1238
        %v1240 = vcombine.high %v1218, %v1218
        %v1241 = vcombine.high %v1225, %v1225
        %v1242 = vcombine.high %v1232, %v1232
        %v1243 = vcombine.high %v1239, %v1239
        %v1244 = vlaneseq
        %v1245 = vshrl.u32 %v1244, 7
        %v1246 = vsub.s32 0, %v1245
        %v1247 = vrot.slane %v1068, %v1246
        %v1248 = vlaneseq
        %v1249 = vshrl.u32 %v1248, 7
        %v1250 = vsub.s32 1, %v1249
        %v1251 = vrot.slane %v1068, %v1250
        %v1252 = vlaneseq
        %v1253 = vshrl.u32 %v1252, 7
        %v1254 = vsub.s32 0, %v1253
        %v1255 = vrot.slane %v1082, %v1254
        %v1256 = vlaneseq
        %v1257 = vshrl.u32 %v1256, 7
        %v1258 = vsub.s32 1, %v1257
        %v1259 = vrot.slane %v1082, %v1258
        %v1260 = vlaneseq
        %v1261 = vshrl.u32 %v1260, 7
        %v1262 = vsub.s32 0, %v1261
        %v1263 = vrot.slane %v1090, %v1262
        %v1264 = vlaneseq
        %v1265 = vshrl.u32 %v1264, 7
        %v1266 = vsub.s32 1, %v1265
        %v1267 = vrot.slane %v1090, %v1266
        %v1268 = vlaneseq
        %v1269 = vshrl.u32 %v1268, 7
        %v1270 = vsub.s32 0, %v1269
        %v1271 = vrot.slane %v1092, %v1270
        %v1272 = vlaneseq
        %v1273 = vshrl.u32 %v1272, 7
        %v1274 = vsub.s32 1, %v1273
        %v1275 = vrot.slane %v1092, %v1274
        %v1276 = vlaneseq
        %v1277 = vshrl.u32 %v1276, 7
        %v1278 = vsub.s32 0, %v1277
        %v1279 = vrot.slane %v1075, %v1278
        %v1280 = vlaneseq
        %v1281 = vshrl.u32 %v1280, 7
        %v1282 = vsub.s32 1, %v1281
        %v1283 = vrot.slane %v1075, %v1282
        %v1284 = vlaneseq
        %v1285 = vshrl.u32 %v1284, 7
        %v1286 = vsub.s32 0, %v1285
        %v1287 = vrot.slane %v1089, %v1286
        %v1288 = vlaneseq
        %v1289 = vshrl.u32 %v1288, 7
        %v1290 = vsub.s32 1, %v1289
        %v1291 = vrot.slane %v1089, %v1290
        %v1292 = vlaneseq
        %v1293 = vshrl.u32 %v1292, 7
        %v1294 = vsub.s32 0, %v1293
        %v1295 = vrot.slane %v1091, %v1294
        %v1296 = vlaneseq
        %v1297 = vshrl.u32 %v1296, 7
        %v1298 = vsub.s32 1, %v1297
        %v1299 = vrot.slane %v1091, %v1298
        %v1300 = vlaneseq
        %v1301 = vshrl.u32 %v1300, 7
        %v1302 = vsub.s32 0, %v1301
        %v1303 = vrot.slane %v1093, %v1302
        %v1304 = vlaneseq
        %v1305 = vshrl.u32 %v1304, 7
        %v1306 = vsub.s32 1, %v1305
        %v1307 = vrot.slane %v1093, %v1306
        %v1308 = vlaneseq
        %v1309 = vshrl.u32 %v1308, 7
        %v1310 = vsub.s32 0, %v1309
        %v1311 = vrot.slane %v1118, %v1310
        %v1312 = vlaneseq
        %v1313 = vshrl.u32 %v1312, 7
        %v1314 = vsub.s32 1, %v1313
        %v1315 = vrot.slane %v1118, %v1314
        %v1316 = vlaneseq
        %v1317 = vshrl.u32 %v1316, 7
        %v1318 = vsub.s32 0, %v1317
        %v1319 = vrot.slane %v1132, %v1318
        %v1320 = vlaneseq
        %v1321 = vshrl.u32 %v1320, 7
        %v1322 = vsub.s32 1, %v1321
        %v1323 = vrot.slane %v1132, %v1322
        %v1324 = vlaneseq
        %v1325 = vshrl.u32 %v1324, 7
        %v1326 = vsub.s32 0, %v1325
        %v1327 = vrot.slane %v1140, %v1326
        %v1328 = vlaneseq
        %v1329 = vshrl.u32 %v1328, 7
        %v1330 = vsub.s32 1, %v1329
        %v1331 = vrot.slane %v1140, %v1330
        %v1332 = vlaneseq
        %v1333 = vshrl.u32 %v1332, 7
        %v1334 = vsub.s32 0, %v1333
        %v1335 = vrot.slane %v1142, %v1334
        %v1336 = vlaneseq
        %v1337 = vshrl.u32 %v1336, 7
        %v1338 = vsub.s32 1, %v1337
        %v1339 = vrot.slane %v1142, %v1338
        %v1340 = vlaneseq
        %v1341 = vshrl.u32 %v1340, 7
        %v1342 = vsub.s32 0, %v1341
        %v1343 = vrot.slane %v1125, %v1342
        %v1344 = vlaneseq
        %v1345 = vshrl.u32 %v1344, 7
        %v1346 = vsub.s32 1, %v1345
        %v1347 = vrot.slane %v1125, %v1346
        %v1348 = vlaneseq
        %v1349 = vshrl.u32 %v1348, 7
        %v1350 = vsub.s32 0, %v1349
        %v1351 = vrot.slane %v1139, %v1350
        %v1352 = vlaneseq
        %v1353 = vshrl.u32 %v1352, 7
        %v1354 = vsub.s32 1, %v1353
        %v1355 = vrot.slane %v1139, %v1354
        %v1356 = vlaneseq
        %v1357 = vshrl.u32 %v1356, 7
        %v1358 = vsub.s32 0, %v1357
        %v1359 = vrot.slane %v1141, %v1358
        %v1360 = vlaneseq
        %v1361 = vshrl.u32 %v1360, 7
        %v1362 = vsub.s32 1, %v1361
        %v1363 = vrot.slane %v1141, %v1362
        %v1364 = vlaneseq
        %v1365 = vshrl.u32 %v1364, 7
        %v1366 = vsub.s32 0, %v1365
        %v1367 = vrot.slane %v1143, %v1366
        %v1368 = vlaneseq
        %v1369 = vshrl.u32 %v1368, 7
        %v1370 = vsub.s32 1, %v1369
        %v1371 = vrot.slane %v1143, %v1370
        %v1372 = vlaneseq
        %v1373 = vshrl.u32 %v1372, 7
        %v1374 = vsub.s32 0, %v1373
        %v1375 = vrot.slane %v1168, %v1374
        %v1376 = vlaneseq
        %v1377 = vshrl.u32 %v1376, 7
        %v1378 = vsub.s32 1, %v1377
        %v1379 = vrot.slane %v1168, %v1378
        %v1380 = vlaneseq
        %v1381 = vshrl.u32 %v1380, 7
        %v1382 = vsub.s32 0, %v1381
        %v1383 = vrot.slane %v1182, %v1382
        %v1384 = vlaneseq
        %v1385 = vshrl.u32 %v1384, 7
        %v1386 = vsub.s32 1, %v1385
        %v1387 = vrot.slane %v1182, %v1386
        %v1388 = vlaneseq
        %v1389 = vshrl.u32 %v1388, 7
        %v1390 = vsub.s32 0, %v1389
        %v1391 = vrot.slane %v1190, %v1390
        %v1392 = vlaneseq
        %v1393 = vshrl.u32 %v1392, 7
        %v1394 = vsub.s32 1, %v1393
        %v1395 = vrot.slane %v1190, %v1394
        %v1396 = vlaneseq
        %v1397 = vshrl.u32 %v1396, 7
        %v1398 = vsub.s32 0, %v1397
        %v1399 = vrot.slane %v1192, %v1398
        %v1400 = vlaneseq
        %v1401 = vshrl.u32 %v1400, 7
        %v1402 = vsub.s32 1, %v1401
        %v1403 = vrot.slane %v1192, %v1402
        %v1404 = vlaneseq
        %v1405 = vshrl.u32 %v1404, 7
        %v1406 = vsub.s32 0, %v1405
        %v1407 = vrot.slane %v1175, %v1406
        %v1408 = vlaneseq
        %v1409 = vshrl.u32 %v1408, 7
        %v1410 = vsub.s32 1, %v1409
        %v1411 = vrot.slane %v1175, %v1410
        %v1412 = vlaneseq
        %v1413 = vshrl.u32 %v1412, 7
        %v1414 = vsub.s32 0, %v1413
        %v1415 = vrot.slane %v1189, %v1414
        %v1416 = vlaneseq
        %v1417 = vshrl.u32 %v1416, 7
        %v1418 = vsub.s32 1, %v1417
        %v1419 = vrot.slane %v1189, %v1418
        %v1420 = vlaneseq
        %v1421 = vshrl.u32 %v1420, 7
        %v1422 = vsub.s32 0, %v1421
        %v1423 = vrot.slane %v1191, %v1422
        %v1424 = vlaneseq
        %v1425 = vshrl.u32 %v1424, 7
        %v1426 = vsub.s32 1, %v1425
        %v1427 = vrot.slane %v1191, %v1426
        %v1428 = vlaneseq
        %v1429 = vshrl.u32 %v1428, 7
        %v1430 = vsub.s32 0, %v1429
        %v1431 = vrot.slane %v1193, %v1430
        %v1432 = vlaneseq
        %v1433 = vshrl.u32 %v1432, 7
        %v1434 = vsub.s32 1, %v1433
        %v1435 = vrot.slane %v1193, %v1434
        %v1436 = vlaneseq
        %v1437 = vshrl.u32 %v1436, 7
        %v1438 = vsub.s32 0, %v1437
        %v1439 = vrot.slane %v1218, %v1438
        %v1440 = vlaneseq
        %v1441 = vshrl.u32 %v1440, 7
        %v1442 = vsub.s32 1, %v1441
        %v1443 = vrot.slane %v1218, %v1442
        %v1444 = vlaneseq
        %v1445 = vshrl.u32 %v1444, 7
        %v1446 = vsub.s32 0, %v1445
        %v1447 = vrot.slane %v1232, %v1446
        %v1448 = vlaneseq
        %v1449 = vshrl.u32 %v1448, 7
        %v1450 = vsub.s32 1, %v1449
        %v1451 = vrot.slane %v1232, %v1450
        %v1452 = vlaneseq
        %v1453 = vshrl.u32 %v1452, 7
        %v1454 = vsub.s32 0, %v1453
        %v1455 = vrot.slane %v1240, %v1454
        %v1456 = vlaneseq
        %v1457 = vshrl.u32 %v1456, 7
        %v1458 = vsub.s32 1, %v1457
        %v1459 = vrot.slane %v1240, %v1458
        %v1460 = vlaneseq
        %v1461 = vshrl.u32 %v1460, 7
        %v1462 = vsub.s32 0, %v1461
        %v1463 = vrot.slane %v1242, %v1462
        %v1464 = vlaneseq
        %v1465 = vshrl.u32 %v1464, 7
        %v1466 = vsub.s32 1, %v1465
        %v1467 = vrot.slane %v1242, %v1466
        %v1468 = vlaneseq
        %v1469 = vshrl.u32 %v1468, 7
        %v1470 = vsub.s32 0, %v1469
        %v1471 = vrot.slane %v1225, %v1470
        %v1472 = vlaneseq
        %v1473 = vshrl.u32 %v1472, 7
        %v1474 = vsub.s32 1, %v1473
        %v1475 = vrot.slane %v1225, %v1474
        %v1476 = vlaneseq
        %v1477 = vshrl.u32 %v1476, 7
        %v1478 = vsub.s32 0, %v1477
        %v1479 = vrot.slane %v1239, %v1478
        %v1480 = vlaneseq
        %v1481 = vshrl.u32 %v1480, 7
        %v1482 = vsub.s32 1, %v1481
        %v1483 = vrot.slane %v1239, %v1482
        %v1484 = vlaneseq
        %v1485 = vshrl.u32 %v1484, 7
        %v1486 = vsub.s32 0, %v1485
        %v1487 = vrot.slane %v1241, %v1486
        %v1488 = vlaneseq
        %v1489 = vshrl.u32 %v1488, 7
        %v1490 = vsub.s32 1, %v1489
        %v1491 = vrot.slane %v1241, %v1490
        %v1492 = vlaneseq
        %v1493 = vshrl.u32 %v1492, 7
        %v1494 = vsub.s32 0, %v1493
        %v1495 = vrot.slane %v1243, %v1494
        %v1496 = vlaneseq
        %v1497 = vshrl.u32 %v1496, 7
        %v1498 = vsub.s32 1, %v1497
        %v1499 = vrot.slane %v1243, %v1498
        %v1500 = vcombine.low %v1247, %v1251
        %v1502 = vunpack.c.l.s4 1983009808
        %v1503 = vunpack.c.0.s8 %v1502
        %v1504 = vlaneseq
        %v1505 = vshrl.u32 %v1504, 7
        %v1506 = vsub.s32 %v1503, %v1505
        %v1507 = vrot.slane %v1500, %v1506
        %v1508 = vcombine.low %v1255, %v1259
        %v1510 = vunpack.c.l.s4 1983009808
        %v1511 = vunpack.c.0.s8 %v1510
        %v1512 = vlaneseq
        %v1513 = vshrl.u32 %v1512, 7
        %v1514 = vsub.s32 %v1511, %v1513
        %v1515 = vrot.slane %v1508, %v1514
        %v1516 = vcombine.low %v1263, %v1267
        %v1518 = vunpack.c.l.s4 1983009808
        %v1519 = vunpack.c.0.s8 %v1518
        %v1520 = vlaneseq
        %v1521 = vshrl.u32 %v1520, 7
        %v1522 = vsub.s32 %v1519, %v1521
        %v1523 = vrot.slane %v1516, %v1522
        %v1524 = vcombine.low %v1271, %v1275
        %v1526 = vunpack.c.l.s4 1983009808
        %v1527 = vunpack.c.0.s8 %v1526
        %v1528 = vlaneseq
        %v1529 = vshrl.u32 %v1528, 7
        %v1530 = vsub.s32 %v1527, %v1529
        %v1531 = vrot.slane %v1524, %v1530
        %v1532 = vcombine.low %v1279, %v1283
        %v1534 = vunpack.c.l.s4 1983009808
        %v1535 = vunpack.c.0.s8 %v1534
        %v1536 = vlaneseq
        %v1537 = vshrl.u32 %v1536, 7
        %v1538 = vsub.s32 %v1535, %v1537
        %v1539 = vrot.slane %v1532, %v1538
        %v1540 = vcombine.low %v1287, %v1291
        %v1542 = vunpack.c.l.s4 1983009808
        %v1543 = vunpack.c.0.s8 %v1542
        %v1544 = vlaneseq
        %v1545 = vshrl.u32 %v1544, 7
        %v1546 = vsub.s32 %v1543, %v1545
        %v1547 = vrot.slane %v1540, %v1546
        %v1548 = vcombine.low %v1295, %v1299
        %v1550 = vunpack.c.l.s4 1983009808
        %v1551 = vunpack.c.0.s8 %v1550
        %v1552 = vlaneseq
        %v1553 = vshrl.u32 %v1552, 7
        %v1554 = vsub.s32 %v1551, %v1553
        %v1555 = vrot.slane %v1548, %v1554
        %v1556 = vcombine.low %v1303, %v1307
        %v1558 = vunpack.c.l.s4 1983009808
        %v1559 = vunpack.c.0.s8 %v1558
        %v1560 = vlaneseq
        %v1561 = vshrl.u32 %v1560, 7
        %v1562 = vsub.s32 %v1559, %v1561
        %v1563 = vrot.slane %v1556, %v1562
        %v1564 = vcombine.low %v1311, %v1315
        %v1566 = vunpack.c.l.s4 1983009808
        %v1567 = vunpack.c.0.s8 %v1566
        %v1568 = vlaneseq
        %v1569 = vshrl.u32 %v1568, 7
        %v1570 = vsub.s32 %v1567, %v1569
        %v1571 = vrot.slane %v1564, %v1570
        %v1572 = vcombine.low %v1319, %v1323
        %v1574 = vunpack.c.l.s4 1983009808
        %v1575 = vunpack.c.0.s8 %v1574
        %v1576 = vlaneseq
        %v1577 = vshrl.u32 %v1576, 7
        %v1578 = vsub.s32 %v1575, %v1577
        %v1579 = vrot.slane %v1572, %v1578
        %v1580 = vcombine.low %v1327, %v1331
        %v1582 = vunpack.c.l.s4 1983009808
        %v1583 = vunpack.c.0.s8 %v1582
        %v1584 = vlaneseq
        %v1585 = vshrl.u32 %v1584, 7
        %v1586 = vsub.s32 %v1583, %v1585
        %v1587 = vrot.slane %v1580, %v1586
        %v1588 = vcombine.low %v1335, %v1339
        %v1590 = vunpack.c.l.s4 1983009808
        %v1591 = vunpack.c.0.s8 %v1590
        %v1592 = vlaneseq
        %v1593 = vshrl.u32 %v1592, 7
        %v1594 = vsub.s32 %v1591, %v1593
        %v1595 = vrot.slane %v1588, %v1594
        %v1596 = vcombine.low %v1343, %v1347
        %v1598 = vunpack.c.l.s4 1983009808
        %v1599 = vunpack.c.0.s8 %v1598
        %v1600 = vlaneseq
        %v1601 = vshrl.u32 %v1600, 7
        %v1602 = vsub.s32 %v1599, %v1601
        %v1603 = vrot.slane %v1596, %v1602
        %v1604 = vcombine.low %v1351, %v1355
        %v1606 = vunpack.c.l.s4 1983009808
        %v1607 = vunpack.c.0.s8 %v1606
        %v1608 = vlaneseq
        %v1609 = vshrl.u32 %v1608, 7
        %v1610 = vsub.s32 %v1607, %v1609
        %v1611 = vrot.slane %v1604, %v1610
        %v1612 = vcombine.low %v1359, %v1363
        %v1614 = vunpack.c.l.s4 1983009808
        %v1615 = vunpack.c.0.s8 %v1614
        %v1616 = vlaneseq
        %v1617 = vshrl.u32 %v1616, 7
        %v1618 = vsub.s32 %v1615, %v1617
        %v1619 = vrot.slane %v1612, %v1618
        %v1620 = vcombine.low %v1367, %v1371
        %v1622 = vunpack.c.l.s4 1983009808
        %v1623 = vunpack.c.0.s8 %v1622
        %v1624 = vlaneseq
        %v1625 = vshrl.u32 %v1624, 7
        %v1626 = vsub.s32 %v1623, %v1625
        %v1627 = vrot.slane %v1620, %v1626
        %v1628 = vcombine.low %v1375, %v1379
        %v1630 = vunpack.c.l.s4 1983009808
        %v1631 = vunpack.c.0.s8 %v1630
        %v1632 = vlaneseq
        %v1633 = vshrl.u32 %v1632, 7
        %v1634 = vsub.s32 %v1631, %v1633
        %v1635 = vrot.slane %v1628, %v1634
        %v1636 = vcombine.low %v1383, %v1387
        %v1638 = vunpack.c.l.s4 1983009808
        %v1639 = vunpack.c.0.s8 %v1638
        %v1640 = vlaneseq
        %v1641 = vshrl.u32 %v1640, 7
        %v1642 = vsub.s32 %v1639, %v1641
        %v1643 = vrot.slane %v1636, %v1642
        %v1644 = vcombine.low %v1391, %v1395
        %v1646 = vunpack.c.l.s4 1983009808
        %v1647 = vunpack.c.0.s8 %v1646
        %v1648 = vlaneseq
        %v1649 = vshrl.u32 %v1648, 7
        %v1650 = vsub.s32 %v1647, %v1649
        %v1651 = vrot.slane %v1644, %v1650
        %v1652 = vcombine.low %v1399, %v1403
        %v1654 = vunpack.c.l.s4 1983009808
        %v1655 = vunpack.c.0.s8 %v1654
        %v1656 = vlaneseq
        %v1657 = vshrl.u32 %v1656, 7
        %v1658 = vsub.s32 %v1655, %v1657
        %v1659 = vrot.slane %v1652, %v1658
        %v1660 = vcombine.low %v1407, %v1411
        %v1662 = vunpack.c.l.s4 1983009808
        %v1663 = vunpack.c.0.s8 %v1662
        %v1664 = vlaneseq
        %v1665 = vshrl.u32 %v1664, 7
        %v1666 = vsub.s32 %v1663, %v1665
        %v1667 = vrot.slane %v1660, %v1666
        %v1668 = vcombine.low %v1415, %v1419
        %v1670 = vunpack.c.l.s4 1983009808
        %v1671 = vunpack.c.0.s8 %v1670
        %v1672 = vlaneseq
        %v1673 = vshrl.u32 %v1672, 7
        %v1674 = vsub.s32 %v1671, %v1673
        %v1675 = vrot.slane %v1668, %v1674
        %v1676 = vcombine.low %v1423, %v1427
        %v1678 = vunpack.c.l.s4 1983009808
        %v1679 = vunpack.c.0.s8 %v1678
        %v1680 = vlaneseq
        %v1681 = vshrl.u32 %v1680, 7
        %v1682 = vsub.s32 %v1679, %v1681
        %v1683 = vrot.slane %v1676, %v1682
        %v1684 = vcombine.low %v1431, %v1435
        %v1686 = vunpack.c.l.s4 1983009808
        %v1687 = vunpack.c.0.s8 %v1686
        %v1688 = vlaneseq
        %v1689 = vshrl.u32 %v1688, 7
        %v1690 = vsub.s32 %v1687, %v1689
        %v1691 = vrot.slane %v1684, %v1690
        %v1692 = vcombine.low %v1439, %v1443
        %v1694 = vunpack.c.l.s4 1983009808
        %v1695 = vunpack.c.0.s8 %v1694
        %v1696 = vlaneseq
        %v1697 = vshrl.u32 %v1696, 7
        %v1698 = vsub.s32 %v1695, %v1697
        %v1699 = vrot.slane %v1692, %v1698
        %v1700 = vcombine.low %v1447, %v1451
        %v1702 = vunpack.c.l.s4 1983009808
        %v1703 = vunpack.c.0.s8 %v1702
        %v1704 = vlaneseq
        %v1705 = vshrl.u32 %v1704, 7
        %v1706 = vsub.s32 %v1703, %v1705
        %v1707 = vrot.slane %v1700, %v1706
        %v1708 = vcombine.low %v1455, %v1459
        %v1710 = vunpack.c.l.s4 1983009808
        %v1711 = vunpack.c.0.s8 %v1710
        %v1712 = vlaneseq
        %v1713 = vshrl.u32 %v1712, 7
        %v1714 = vsub.s32 %v1711, %v1713
        %v1715 = vrot.slane %v1708, %v1714
        %v1716 = vcombine.low %v1463, %v1467
        %v1718 = vunpack.c.l.s4 1983009808
        %v1719 = vunpack.c.0.s8 %v1718
        %v1720 = vlaneseq
        %v1721 = vshrl.u32 %v1720, 7
        %v1722 = vsub.s32 %v1719, %v1721
        %v1723 = vrot.slane %v1716, %v1722
        %v1724 = vcombine.low %v1471, %v1475
        %v1726 = vunpack.c.l.s4 1983009808
        %v1727 = vunpack.c.0.s8 %v1726
        %v1728 = vlaneseq
        %v1729 = vshrl.u32 %v1728, 7
        %v1730 = vsub.s32 %v1727, %v1729
        %v1731 = vrot.slane %v1724, %v1730
        %v1732 = vcombine.low %v1479, %v1483
        %v1734 = vunpack.c.l.s4 1983009808
        %v1735 = vunpack.c.0.s8 %v1734
        %v1736 = vlaneseq
        %v1737 = vshrl.u32 %v1736, 7
        %v1738 = vsub.s32 %v1735, %v1737
        %v1739 = vrot.slane %v1732, %v1738
        %v1740 = vcombine.low %v1487, %v1491
        %v1742 = vunpack.c.l.s4 1983009808
        %v1743 = vunpack.c.0.s8 %v1742
        %v1744 = vlaneseq
        %v1745 = vshrl.u32 %v1744, 7
        %v1746 = vsub.s32 %v1743, %v1745
        %v1747 = vrot.slane %v1740, %v1746
        %v1748 = vcombine.low %v1495, %v1499
        %v1750 = vunpack.c.l.s4 1983009808
        %v1751 = vunpack.c.0.s8 %v1750
        %v1752 = vlaneseq
        %v1753 = vshrl.u32 %v1752, 7
        %v1754 = vsub.s32 %v1751, %v1753
        %v1755 = vrot.slane %v1748, %v1754
        %1788 = vst [vmem:[%s315] sm:$0xf] %v1507
        %1789 = vst [vmem:[%s315 + $0x4] sm:$0xf] %v1515
        %1790 = vst [vmem:[%s315 + $0x8] sm:$0xf] %v1523
        %1791 = vst [vmem:[%s315 + $0xc] sm:$0xf] %v1531
        %1792 = vst [vmem:[%s315 + $0x10] sm:$0xf] %v1539
        %1793 = vst [vmem:[%s315 + $0x14] sm:$0xf] %v1547
        %1794 = vst [vmem:[%s315 + $0x18] sm:$0xf] %v1555
        %1795 = vst [vmem:[%s315 + $0x1c] sm:$0xf] %v1563
        %1796 = vst [vmem:[%s315 + $0x20] sm:$0xf] %v1571
        %1797 = vst [vmem:[%s315 + $0x24] sm:$0xf] %v1579
        %1798 = vst [vmem:[%s315 + $0x28] sm:$0xf] %v1587
        %1799 = vst [vmem:[%s315 + $0x2c] sm:$0xf] %v1595
        %1800 = vst [vmem:[%s315 + $0x30] sm:$0xf] %v1603
        %1801 = vst [vmem:[%s315 + $0x34] sm:$0xf] %v1611
        %1802 = vst [vmem:[%s315 + $0x38] sm:$0xf] %v1619
        %1803 = vst [vmem:[%s315 + $0x3c] sm:$0xf] %v1627
        %1804 = vst [vmem:[%s315 + $0x40] sm:$0xf] %v1635
        %1805 = vst [vmem:[%s315 + $0x44] sm:$0xf] %v1643
        %1806 = vst [vmem:[%s315 + $0x48] sm:$0xf] %v1651
        %1807 = vst [vmem:[%s315 + $0x4c] sm:$0xf] %v1659
        %1808 = vst [vmem:[%s315 + $0x50] sm:$0xf] %v1667
        %1809 = vst [vmem:[%s315 + $0x54] sm:$0xf] %v1675
        %1810 = vst [vmem:[%s315 + $0x58] sm:$0xf] %v1683
        %1811 = vst [vmem:[%s315 + $0x5c] sm:$0xf] %v1691
        %1812 = vst [vmem:[%s315 + $0x60] sm:$0xf] %v1699
        %1813 = vst [vmem:[%s315 + $0x64] sm:$0xf] %v1707
        %1814 = vst [vmem:[%s315 + $0x68] sm:$0xf] %v1715
        %1815 = vst [vmem:[%s315 + $0x6c] sm:$0xf] %v1723
        %1816 = vst [vmem:[%s315 + $0x70] sm:$0xf] %v1731
        %1817 = vst [vmem:[%s315 + $0x74] sm:$0xf] %v1739
        %1818 = vst [vmem:[%s315 + $0x78] sm:$0xf] %v1747
        %1819 = vst [vmem:[%s315 + $0x7c] sm:$0xf] %v1755
      $region60: #{block_forward.1} parent=47 // pred_fallthru
        _
      %s1820 = smul.u32 %s23, %s22
      %s1821 = smul.u32 32, %s1820
      %p1822 = scmp.lt.s32.totalorder %s1821, 31
      %s1823 = scalar_select %p1822, %s1821, 31
      %s1824 = smul.addr %s1823, 2
      %s1825 = smul.addr %s1824, 2
      %s1826 = scalar_lea.vmem %s7, %s1825
      // Predicated region
      $region65: #{block_forward.1} parent=47 // pred_check
        %p1827 = pneg %p206
      $region66: #{block_forward.1} parent=47 // pred_check_branch
        %1829 = sbr.rel (%p1827) target = $region68
      $region67: #{block_forward.1} parent=47 // pred_region
        %s1830 = smul.u32 %s23, %s22
        %s1831 = smul.u32 32, %s1830
      $region68: #{block_forward.1} parent=47 // pred_fallthru
        _
    $region48: #{block_forward.1} parent=5 // pred_fallthru
      _
    %p1832 = scmp.le.s32.totalorder 2, %s13
    // Predicated region
    $region69: #{block_forward.1} parent=5 // pred_check
      %p1833 = pneg %p1832
    $region70: #{block_forward.1} parent=5 // pred_check_branch
      %1835 = sbr.rel (%p1833) target = $region72
    $region71: #{block_forward.1} parent=5 // pred_region
      %s1836 = ssub.s32 %s13, 2
      // Predicated region
      $region73: #{block_forward.1} parent=71 // pred_check
        %p1837 = pneg %p212
      $region74: #{block_forward.1} parent=71 // pred_check_branch
        %1839 = sbr.rel (%p1837) target = $region76
      $region75: #{block_forward.1} parent=71 // pred_region
        %s1840 = smul.u32 %s25, %s24
        %s1841 = smul.u32 32, %s1840
        %p1842 = scmp.lt.s32.totalorder %s1841, 31
        %s1843 = scalar_select %p1842, %s1841, 31
        %s1844 = smul.addr %s1843, 2
        %s1845 = smul.addr %s1844, 2
        %s1846 = scalar_lea.vmem %s7, %s1845
      $region76: #{block_forward.1} parent=71 // pred_fallthru
        _
    $region72: #{block_forward.1} parent=5 // pred_fallthru
      _
  $region6: #{block_forward.1} parent=0 // loop_footer
    %s17 = sadd.s32 1, %s13
  $region7: #{block_forward.1} parent=0 // loop_footer_branch
    %12 = sbr.rel target = $region3
  $region8: #{block_forward.1} parent=0 // loop_exit
    _

</llo_original>
